<compile_context>
chip_gen: v7x
topology: tpu7x:2x2x1
jax: 0.10.0
libtpu: 0.0.40
codegen_flags: <defaults>
</compile_context>

<pallas_src>
import jax
import jax.numpy as jnp
from jax.experimental import pallas as pl
from jax.experimental.pallas import tpu as pltpu


# ---------------------------------------------------------------------------
# Kernel 1: PLM body (GELU MLP layer) on mixed + share paths, stacked matmul.
# ---------------------------------------------------------------------------
def plm_body_kernel(xi_ref, xs_ref, w1_ref, b1_ref, hm_ref, hs_ref):
    tm = xi_ref.shape[0]
    xs = xs_ref[...]
    # Mixed (label) path inputs: (issue + share) / 2 in f32, fed to the MXU in
    # bf16.  Share path: ReverseLayerF is identity in forward (alpha only
    # scales gradients).
    mixed = ((xi_ref[...].astype(jnp.float32) + xs.astype(jnp.float32)) * 0.5
             ).astype(jnp.bfloat16)
    stacked = jnp.concatenate([mixed, xs], axis=0)            # [2*tm, H] bf16
    h = jnp.dot(stacked, w1_ref[...],
                preferred_element_type=jnp.float32) + b1_ref[...]
    # tanh-approximate GELU in f32 (EUP slot; v5e has no bf16 VPU/EUP).
    # TODO(synk): the reference HF PLM may use exact (erf) GELU.
    h = jax.nn.gelu(h, approximate=True).astype(jnp.bfloat16)
    hm_ref[...] = h[:tm]
    hs_ref[...] = h[tm:]


def plm_body(xi, xs, w1, b1, *, tm=128):
    BS, H = xi.shape
    F = w1.shape[1]
    tm = min(tm, BS)
    assert BS % tm == 0, (BS, tm)

    row_in = pl.BlockSpec((tm, H), lambda i: (i, 0))
    row_out = pl.BlockSpec((tm, F), lambda i: (i, 0))
    # NOTE: W1/b1 have a constant block index; at production sizes give them
    # pipeline_mode=pl.Buffered(1) (single-buffer the resident weights) to
    # free VMEM for larger activation tiles.  Trivial at this toy size.
    full = lambda shape: pl.BlockSpec(shape, lambda i: (0, 0))

    return pl.pallas_call(
        plm_body_kernel,
        out_shape=(
            jax.ShapeDtypeStruct((BS, F), jnp.bfloat16),
            jax.ShapeDtypeStruct((BS, F), jnp.bfloat16),
        ),
        grid_spec=pltpu.PrefetchScalarGridSpec(
            num_scalar_prefetch=0,
            grid=(BS // tm,),
            in_specs=[row_in, row_in, full((H, F)), full((1, F))],
            out_specs=[row_out, row_out],
        ),
        compiler_params=pltpu.CompilerParams(
            dimension_semantics=("parallel",)),
    )(xi, xs, w1, b1)


# ---------------------------------------------------------------------------
# Kernel 2: LM head on the B masked rows (mixed + share stacked) fused with
# both verbalizer projections, vocab-tiled with a resident f32 accumulator.
# ---------------------------------------------------------------------------
def lm_head_verbalizer_kernel(h_ref, w2_ref, b2_ref, sel_ref, out_ref,
                              acc_ref, bias_ref):
    j = pl.program_id(0)

    @pl.when(j == 0)
    def _():
        acc_ref[...] = jnp.zeros_like(acc_ref)
        bias_ref[...] = jnp.zeros_like(bias_ref)

    # Vocab-logit tile for the 2B masked rows (mixed rows then share rows).
    logits = jnp.dot(h_ref[...], w2_ref[...],
                     preferred_element_type=jnp.float32)       # [2B, tn] f32
    # Verbalizer projection of this vocab tile (mean-aggregation weights are
    # baked into sel).  The rank-1 bias contribution is accumulated separately
    # so its (1,128)->(2B,128) broadcast happens once, not per vocab tile.
    acc_ref[...] += jnp.dot(logits, sel_ref[...],
                            preferred_element_type=jnp.float32)
    bias_ref[...] += jnp.dot(b2_ref[...], sel_ref[...],
                             preferred_element_type=jnp.float32)

    @pl.when(j == pl.num_programs(0) - 1)
    def _():
        out_ref[...] = acc_ref[...] + bias_ref[...]


def lm_head_verbalizer(h_masked, w2, b2, sel, *, tn=512):
    R, F = h_masked.shape          # R = 2*B (mixed rows then share rows)
    V = w2.shape[1]
    C = sel.shape[1]               # lane-padded to 128
    tn = min(tn, V)
    assert V % tn == 0, (V, tn)

    return pl.pallas_call(
        lm_head_verbalizer_kernel,
        out_shape=jax.ShapeDtypeStruct((R, C), jnp.float32),
        grid_spec=pltpu.PrefetchScalarGridSpec(
            num_scalar_prefetch=0,
            grid=(V // tn,),
            in_specs=[
                pl.BlockSpec((R, F), lambda j: (0, 0)),        # masked hidden
                pl.BlockSpec((F, tn), lambda j: (0, j)),       # W2 vocab tile
                pl.BlockSpec((1, tn), lambda j: (0, j)),       # b2 vocab tile
                pl.BlockSpec((tn, C), lambda j: (j, 0)),       # sel vocab tile
            ],
            out_specs=pl.BlockSpec((R, C), lambda j: (0, 0)),
            scratch_shapes=[
                pltpu.VMEM((R, C), jnp.float32),               # acc
                pltpu.VMEM((1, C), jnp.float32),               # bias acc
            ],
        ),
        compiler_params=pltpu.CompilerParams(
            dimension_semantics=("arbitrary",)),  # accumulator across vocab
    )(h_masked, w2, b2, sel)


# ---------------------------------------------------------------------------
# Glue: template processing, extract_at_mask, and the overall forward.
# ---------------------------------------------------------------------------
def forward(params, batch, issue, alpha):
    del alpha  # only used by ReverseLayerF in the backward pass
    input_ids = batch["input_ids"]   # [B, S] int32
    loss_ids = batch["loss_ids"]     # [B, S] int32, exactly one >0 per example
    B, S = input_ids.shape

    # template_<issue>.process_batch / template_share.process_batch:
    # word-embedding lookup + learned soft-prompt embedding per position.
    base = params["word_emb"][input_ids]               # [B, S, H] f32
    out1 = base + params["soft_emb"][issue][None]      # issue template
    out2 = base + params["soft_emb"]["share"][None]    # share template

    H = base.shape[-1]
    # bf16 at the kernel boundary (MXU inputs); f32 accumulation inside.
    xi = out1.reshape(B * S, H).astype(jnp.bfloat16)
    xs = out2.reshape(B * S, H).astype(jnp.bfloat16)

    h_mixed, h_share = plm_body(
        xi, xs, params["w1"].astype(jnp.bfloat16), params["b1"], tm=128)

    # extract_at_mask fused BEFORE the LM head: only the B masked rows reach
    # the vocab projection.  Assumes exactly one loss_ids>0 per example (same
    # squeeze as the PyTorch [B, 1, V] -> [B, V] view).
    mask_pos = jnp.argmax(loss_ids, axis=1)            # [B]
    flat_idx = jnp.arange(B) * S + mask_pos
    h_stacked = jnp.concatenate(
        [h_mixed[flat_idx], h_share[flat_idx]], axis=0)  # [2B, F] bf16

    proj = lm_head_verbalizer(
        h_stacked, params["w2"].astype(jnp.bfloat16), params["b2"],
        params["sel_combined"], tn=512)                # [2B, 128] f32

    CL = params["num_label_classes"]
    CI = params["num_issue_classes"]
    label_words_logits = proj[:B, :CL]                 # mixed path
    issue_logits = proj[B:, CL:CL + CI]                # share path
    return label_words_logits, issue_logits, out1, out2


if __name__ == "__main__":
    # Small but tile-aligned: batch=4, seq=64, hidden=256, ffn=512, vocab=1024
    # -> 2 row tiles of 128 and 2 vocab tiles of 512.
    B, S, H, F, V = 4, 64, 256, 512, 1024
    CL, CI = 2, 3                    # label classes / issue classes
    CPAD = 128                       # lane-dense fused verbalizer width

    key = jax.random.PRNGKey(0)
    ks = jax.random.split(key, 8)

    params = {
        "word_emb": jax.random.normal(ks[0], (V, H), jnp.float32) * 0.02,
        "soft_emb": {
            "gun": jax.random.normal(ks[1], (S, H), jnp.float32) * 0.02,
            "share": jax.random.normal(ks[2], (S, H), jnp.float32) * 0.02,
        },
        "w1": jax.random.normal(ks[3], (H, F), jnp.float32) * 0.1,
        "b1": jax.random.normal(ks[4], (1, F), jnp.float32) * 0.01,
        "w2": jax.random.normal(ks[5], (F, V), jnp.float32) * 0.1,
        "b2": jax.random.normal(ks[6], (1, V), jnp.float32) * 0.01,
        "num_label_classes": CL,
        "num_issue_classes": CI,
    }

    # Verbalizer label words (mean aggregation -> 1/num_words weights), packed
    # into a single lane-dense [V, 128] selection matrix: label classes in
    # columns [0, CL), issue classes in columns [CL, CL+CI), rest zero.
    sel = jnp.zeros((V, CPAD), jnp.float32)
    label_words = [[3, 7], [11, 5]]          # 2 label classes, 2 words each
    issue_words = [[2], [9], [20]]           # 3 issue classes, 1 word each
    for c, words in enumerate(label_words):
        sel = sel.at[jnp.array(words), c].set(1.0 / len(words))
    for c, words in enumerate(issue_words):
        sel = sel.at[jnp.array(words), CL + c].set(1.0 / len(words))
    params["sel_combined"] = sel

    input_ids = jax.random.randint(ks[7], (B, S), 0, V, dtype=jnp.int32)
    mask_pos = jnp.array([3, 5, 17, 40], dtype=jnp.int32)
    loss_ids = jnp.zeros((B, S), jnp.int32).at[jnp.arange(B), mask_pos].set(1)
    batch = {"input_ids": input_ids, "loss_ids": loss_ids}

    label_logits, issue_logits, out1, out2 = forward(
        params, batch, issue="gun", alpha=0.5)
    jax.block_until_ready((label_logits, issue_logits, out1, out2))

    # ---- pure-JAX reference with the same bf16-at-the-boundary numerics ----
    base = params["word_emb"][input_ids]
    r1 = base + params["soft_emb"]["gun"][None]
    r2 = base + params["soft_emb"]["share"][None]
    xi = r1.reshape(B * S, H).astype(jnp.bfloat16)
    xs = r2.reshape(B * S, H).astype(jnp.bfloat16)
    w1b = params["w1"].astype(jnp.bfloat16)
    w2b = params["w2"].astype(jnp.bfloat16)
    mixed = ((xi.astype(jnp.float32) + xs.astype(jnp.float32)) * 0.5
             ).astype(jnp.bfloat16)
    hm = jax.nn.gelu(jnp.dot(mixed, w1b, preferred_element_type=jnp.float32)
                     + params["b1"], approximate=True).astype(jnp.bfloat16)
    hs = jax.nn.gelu(jnp.dot(xs, w1b, preferred_element_type=jnp.float32)
                     + params["b1"], approximate=True).astype(jnp.bfloat16)
    flat = jnp.arange(B) * S + mask_pos
    logit_m = jnp.dot(hm[flat], w2b,
                      preferred_element_type=jnp.float32) + params["b2"]
    logit_s = jnp.dot(hs[flat], w2b,
                      preferred_element_type=jnp.float32) + params["b2"]
    ref_label = logit_m @ sel[:, :CL]
    ref_issue = logit_s @ sel[:, CL:CL + CI]

    assert label_logits.shape == (B, CL)
    assert issue_logits.shape == (B, CI)
    assert out1.shape == (B, S, H) and out2.shape == (B, S, H)
    assert jnp.max(jnp.abs(label_logits - ref_label)) < 1e-2
    assert jnp.max(jnp.abs(issue_logits - ref_issue)) < 1e-2
    print("KERNEL_OK")
</pallas_src>

<mosaic_0001>
module attributes {stable_mosaic.version = 11 : i64} {
  func.func @plm_body_kernel(%arg0: i32, %arg1: memref<128x256xbf16, #tpu.memory_space<vmem>>, %arg2: memref<128x256xbf16, #tpu.memory_space<vmem>>, %arg3: memref<256x512xbf16, #tpu.memory_space<vmem>>, %arg4: memref<1x512xf32, #tpu.memory_space<vmem>>, %arg5: memref<128x512xbf16, #tpu.memory_space<vmem>>, %arg6: memref<128x512xbf16, #tpu.memory_space<vmem>>) attributes {dimension_semantics = [#tpu.dimension_semantics<parallel>], iteration_bounds = array<i64: 2>, scalar_prefetch = 0 : i64, scratch_operands = 0 : i64, tpu.core_type = #tpu.core_type<tc>, window_params = [{transform_indices = @transform_0, window_bounds = array<i64: 128, 256>}, {transform_indices = @transform_1, window_bounds = array<i64: 128, 256>}, {pipeline_mode = #tpu.pipeline_mode<synchronous>, transform_indices = @transform_2, window_bounds = array<i64: 256, 512>}, {pipeline_mode = #tpu.pipeline_mode<synchronous>, transform_indices = @transform_3, window_bounds = array<i64: 1, 512>}, {transform_indices = @transform_4, window_bounds = array<i64: 128, 512>}, {transform_indices = @transform_5, window_bounds = array<i64: 128, 512>}]} {
    %c0 = arith.constant 0 : index
    %c0_0 = arith.constant 0 : index
    %0 = vector.load %arg2[%c0, %c0_0] : memref<128x256xbf16, #tpu.memory_space<vmem>>, vector<128x256xbf16>
    %c0_1 = arith.constant 0 : index
    %c0_2 = arith.constant 0 : index
    %1 = vector.load %arg1[%c0_1, %c0_2] : memref<128x256xbf16, #tpu.memory_space<vmem>>, vector<128x256xbf16>
    %2 = arith.extf %1 : vector<128x256xbf16> to vector<128x256xf32>
    %3 = arith.extf %0 : vector<128x256xbf16> to vector<128x256xf32>
    %4 = arith.addf %2, %3 : vector<128x256xf32>
    %cst = arith.constant 5.000000e-01 : f32
    %5 = vector.broadcast %cst : f32 to vector<128x256xf32>
    %6 = arith.mulf %4, %5 : vector<128x256xf32>
    %7 = arith.truncf %6 : vector<128x256xf32> to vector<128x256xbf16>
    %8 = tpu.concatenate %7, %0 in 0 : vector<128x256xbf16>, vector<128x256xbf16> -> vector<256x256xbf16>
    %c0_3 = arith.constant 0 : index
    %c0_4 = arith.constant 0 : index
    %9 = vector.load %arg3[%c0_3, %c0_4] : memref<256x512xbf16, #tpu.memory_space<vmem>>, vector<256x512xbf16>
    %cst_5 = arith.constant dense<0.000000e+00> : vector<256x512xf32>
    %10 = tpu.matmul %8, %9, %cst_5 {dimension_numbers = #tpu.dot_dimension_numbers<[1], [0], [0], [1], [0, 0, 1, 1], [], []>} : vector<256x256xbf16>, vector<256x512xbf16>, vector<256x512xf32> -> vector<256x512xf32>
    %c0_6 = arith.constant 0 : index
    %c0_7 = arith.constant 0 : index
    %11 = vector.load %arg4[%c0_6, %c0_7] : memref<1x512xf32, #tpu.memory_space<vmem>>, vector<1x512xf32>
    %12 = vector.broadcast %11 : vector<1x512xf32> to vector<256x512xf32>
    %13 = arith.addf %10, %12 : vector<256x512xf32>
    %14 = arith.mulf %13, %13 : vector<256x512xf32>
    %15 = arith.mulf %13, %14 : vector<256x512xf32>
    %cst_8 = arith.constant 4.471500e-02 : f32
    %16 = vector.broadcast %cst_8 : f32 to vector<256x512xf32>
    %17 = arith.mulf %16, %15 : vector<256x512xf32>
    %18 = arith.addf %13, %17 : vector<256x512xf32>
    %cst_9 = arith.constant 0.797884583 : f32
    %19 = vector.broadcast %cst_9 : f32 to vector<256x512xf32>
    %20 = arith.mulf %19, %18 : vector<256x512xf32>
    %21 = math.tanh %20 : vector<256x512xf32>
    %cst_10 = arith.constant 1.000000e+00 : f32
    %22 = vector.broadcast %cst_10 : f32 to vector<256x512xf32>
    %23 = arith.addf %22, %21 : vector<256x512xf32>
    %cst_11 = arith.constant 5.000000e-01 : f32
    %24 = vector.broadcast %cst_11 : f32 to vector<256x512xf32>
    %25 = arith.mulf %24, %23 : vector<256x512xf32>
    %26 = arith.mulf %13, %25 : vector<256x512xf32>
    %27 = arith.truncf %26 : vector<256x512xf32> to vector<256x512xbf16>
    %28 = vector.extract_strided_slice %27 {offsets = [0, 0], sizes = [128, 512], strides = [1, 1]} : vector<256x512xbf16> to vector<128x512xbf16>
    %c0_12 = arith.constant 0 : index
    %c0_13 = arith.constant 0 : index
    %29 = vector.load %arg5[%c0_12, %c0_13] : memref<128x512xbf16, #tpu.memory_space<vmem>>, vector<128x512xbf16>
    tpu.vector_store %arg5[%c0_12, %c0_13], %28 {strides = array<i32>} : memref<128x512xbf16, #tpu.memory_space<vmem>>, vector<128x512xbf16>,
    %30 = vector.extract_strided_slice %27 {offsets = [128, 0], sizes = [128, 512], strides = [1, 1]} : vector<256x512xbf16> to vector<128x512xbf16>
    %c0_14 = arith.constant 0 : index
    %c0_15 = arith.constant 0 : index
    %31 = vector.load %arg6[%c0_14, %c0_15] : memref<128x512xbf16, #tpu.memory_space<vmem>>, vector<128x512xbf16>
    tpu.vector_store %arg6[%c0_14, %c0_15], %30 {strides = array<i32>} : memref<128x512xbf16, #tpu.memory_space<vmem>>, vector<128x512xbf16>,
    return
  }
  func.func @transform_0(%arg0: i32) -> (i32, i32) {
    %c0_i32 = arith.constant 0 : i32
    %c0_i32_0 = arith.constant 0 : i32
    return %arg0, %c0_i32 : i32, i32
  }
  func.func @transform_1(%arg0: i32) -> (i32, i32) {
    %c0_i32 = arith.constant 0 : i32
    %c0_i32_0 = arith.constant 0 : i32
    return %arg0, %c0_i32 : i32, i32
  }
  func.func @transform_2(%arg0: i32) -> (i32, i32) {
    %c0_i32 = arith.constant 0 : i32
    %c0_i32_0 = arith.constant 0 : i32
    %c0_i32_1 = arith.constant 0 : i32
    return %c0_i32, %c0_i32_0 : i32, i32
  }
  func.func @transform_3(%arg0: i32) -> (i32, i32) {
    %c0_i32 = arith.constant 0 : i32
    %c0_i32_0 = arith.constant 0 : i32
    %c0_i32_1 = arith.constant 0 : i32
    return %c0_i32, %c0_i32_0 : i32, i32
  }
  func.func @transform_4(%arg0: i32) -> (i32, i32) {
    %c0_i32 = arith.constant 0 : i32
    %c0_i32_0 = arith.constant 0 : i32
    return %arg0, %c0_i32 : i32, i32
  }
  func.func @transform_5(%arg0: i32) -> (i32, i32) {
    %c0_i32 = arith.constant 0 : i32
    %c0_i32_0 = arith.constant 0 : i32
    return %arg0, %c0_i32 : i32, i32
  }
}

</mosaic_0001>

<llo_original>
// kernel: tpu_custom_call.1
$region0: #{tpu_custom_call.1}
  #allocation0 [shape = 'u32[]', space=smem, size = 0x4, offset = 0x4, fixed_abs, tag = 'smem constant byte address 0x4 - core index']
  #allocation1 [shape = 'u32[144,128]{1,0:T(1,128)}', space=vmem, size = 0x12000, scoped, tag = 'internal scratch']
  %s0 = inlined_call_operand.hbm [shape: bf16[256,256], index: 0, kind: input, shape index: {}]
  %s1 = inlined_call_operand.hbm [shape: bf16[256,256], index: 1, kind: input, shape index: {}]
  %s2 = inlined_call_operand.hbm [shape: bf16[256,512], index: 2, kind: input, shape index: {}]
  %s3 = inlined_call_operand.vmem [shape: f32[1,512], index: 3, kind: input, shape index: {}]
  %s4 = inlined_call_operand.hbm [shape: bf16[256,512], index: 4, kind: output, shape index: {0}]
  %s5 = inlined_call_operand.hbm [shape: bf16[256,512], index: 5, kind: output, shape index: {1}]
  %6 = xla_tuple %s4, %s5
  %s7 = sld [smem:[#allocation0]]
  $region69: #{tpu_custom_call.1} parent=0
    _
  %s9 = ssub.s32 1, %s7
  %s10 = scalar_select 0, %s9, %s7
  $region1: #{tpu_custom_call.1} parent=0
    #allocation2 [shape = 'u8[131072]{0}', space=vmem, size = 0x20000, scoped, tag = 'input window, operand 0']
    #allocation3 [shape = 's32[2]{0}', space=sflag, size = 0x8, scoped, tag = 'scoped memory for tpu_custom_call.1']
    #allocation4 [shape = 's32[2]{0}', space=sflag, size = 0x8, scoped, tag = 'scoped memory for tpu_custom_call.1']
    #allocation5 [shape = 'u8[131072]{0}', space=vmem, size = 0x20000, scoped, tag = 'input window, operand 1']
    #allocation6 [shape = 's32[2]{0}', space=sflag, size = 0x8, scoped, tag = 'scoped memory for tpu_custom_call.1']
    #allocation7 [shape = 'u8[262144]{0}', space=vmem, size = 0x40000, scoped, tag = 'input window, operand 2, single buffered']
    #allocation8 [shape = 'u8[262144]{0}', space=vmem, size = 0x40000, scoped, tag = 'output window, operand 0']
    #allocation9 [shape = 'u8[262144]{0}', space=vmem, size = 0x40000, scoped, tag = 'output window, operand 1']
    #allocation10 [shape = 's32[2]{0}', space=sflag, size = 0x8, scoped, tag = 'scoped memory for tpu_custom_call.1']
    %11 = vsyncpa [#allocation3], 0
    %s12 = scalar_lea.sflag [#allocation3], 1
    %13 = vsyncpa %s12, 0
    %14 = vsyncpa [#allocation6], 0
    %s15 = scalar_lea.sflag [#allocation6], 1
    %16 = vsyncpa %s15, 0
    %17 = vsyncpa [#allocation4], 0
    %s18 = scalar_lea.sflag [#allocation4], 1
    %19 = vsyncpa %s18, 0
    %20 = vsyncpa [#allocation10], 0
    %s21 = scalar_lea.sflag [#allocation10], 1
    %22 = vsyncpa %s21, 0
    loop: start=0, step=1, limit=4
    $region2: #{tpu_custom_call.1} parent=1 // loop_pre_header
      _
    $region3: #{tpu_custom_call.1} parent=1 // loop_header
      %s24 = sphi 0, %s28
      %p25 = scmp.ge.s32.totalorder %s24, 4
      %s34 = sphi 0, %s36
      %s37 = sphi 0, %s34
      %s38 = sphi 0, %s37
      %s54 = sphi 0, %s38
      %s60 = sphi 0, %s62
      %s63 = sphi 0, %s60
      %s64 = sphi 0, %s63
      %s80 = sphi 0, %s64
      %s84 = sphi 0, %s84
      %s86 = sphi 0, %s84
      %s87 = sphi 0, %s86
      %s101 = sphi 0, %s87
      %s105 = sphi 0, %s105
      %s107 = sphi 0, %s105
      %s108 = sphi 0, %s107
      %s122 = sphi 0, %s108
      %s128 = sphi 0, %s130
      %s131 = sphi 0, %s128
      %s132 = sphi 0, %s131
      %s148 = sphi 0, %s132
      %s154 = sphi 0, %s156
      %s157 = sphi 0, %s154
      %s158 = sphi 0, %s157
      %s174 = sphi 0, %s158
    $region4: #{tpu_custom_call.1} parent=1 // loop_header_branch
      %27 = sbr.rel (%p25) target = $region8
    $region5: #{tpu_custom_call.1} parent=1 // loop_body
      %s29 = ssub.s32 %s24, 1
      %s30 = ssub.s32 %s24, 2
      %s31 = sadd.s32 %s24, 1
      %s32 = ssub.s32 %s24, %s31
      %p33 = scmp.eq.s32.totalorder %s32, 0
      %s35 = sadd.s32 %s34, 1
      %s36 = scalar_select %p33, %s34, %s35
      %p39 = pneg %p33
      %p40 = scmp.eq.s32.totalorder %s24, 1
      %p41 = por %p39, %p40
      %p42 = scmp.ne.s32.totalorder %s34, %s37
      %p43 = scmp.eq.s32.totalorder %s24, 0
      %p44 = por %p42, %p43
      %p45 = scmp.ne.s32.totalorder %s34, %s37
      %p46 = scmp.eq.s32.totalorder %s29, 1
      %p47 = por %p45, %p46
      %p48 = scmp.ne.s32.totalorder %s37, %s38
      %p49 = scmp.eq.s32.totalorder %s29, 0
      %p50 = por %p48, %p49
      %p51 = scmp.ne.s32.totalorder %s37, %s38
      %p52 = scmp.eq.s32.totalorder %s30, 1
      %p53 = por %p51, %p52
      %p55 = scmp.ne.s32.totalorder %s38, %s54
      %p56 = scmp.eq.s32.totalorder %s30, 0
      %p57 = por %p55, %p56
      %s58 = ssub.s32 %s24, %s31
      %p59 = scmp.eq.s32.totalorder %s58, 0
      %s61 = sadd.s32 %s60, 1
      %s62 = scalar_select %p59, %s60, %s61
      %p65 = pneg %p59
      %p66 = scmp.eq.s32.totalorder %s24, 1
      %p67 = por %p65, %p66
      %p68 = scmp.ne.s32.totalorder %s60, %s63
      %p69 = scmp.eq.s32.totalorder %s24, 0
      %p70 = por %p68, %p69
      %p71 = scmp.ne.s32.totalorder %s60, %s63
      %p72 = scmp.eq.s32.totalorder %s29, 1
      %p73 = por %p71, %p72
      %p74 = scmp.ne.s32.totalorder %s63, %s64
      %p75 = scmp.eq.s32.totalorder %s29, 0
      %p76 = por %p74, %p75
      %p77 = scmp.ne.s32.totalorder %s63, %s64
      %p78 = scmp.eq.s32.totalorder %s30, 1
      %p79 = por %p77, %p78
      %p81 = scmp.ne.s32.totalorder %s64, %s80
      %p82 = scmp.eq.s32.totalorder %s30, 0
      %p83 = por %p81, %p82
      %s85 = sadd.s32 %s84, 1
      %p88 = scmp.eq.s32.totalorder %s24, 1
      %p89 = scmp.ne.s32.totalorder %s84, %s86
      %p90 = scmp.eq.s32.totalorder %s24, 0
      %p91 = por %p89, %p90
      %p92 = scmp.ne.s32.totalorder %s84, %s86
      %p93 = scmp.eq.s32.totalorder %s29, 1
      %p94 = por %p92, %p93
      %p95 = scmp.ne.s32.totalorder %s86, %s87
      %p96 = scmp.eq.s32.totalorder %s29, 0
      %p97 = por %p95, %p96
      %p98 = scmp.ne.s32.totalorder %s86, %s87
      %p99 = scmp.eq.s32.totalorder %s30, 1
      %p100 = por %p98, %p99
      %p102 = scmp.ne.s32.totalorder %s87, %s101
      %p103 = scmp.eq.s32.totalorder %s30, 0
      %p104 = por %p102, %p103
      %s106 = sadd.s32 %s105, 1
      %p109 = scmp.eq.s32.totalorder %s24, 1
      %p110 = scmp.ne.s32.totalorder %s105, %s107
      %p111 = scmp.eq.s32.totalorder %s24, 0
      %p112 = por %p110, %p111
      %p113 = scmp.ne.s32.totalorder %s105, %s107
      %p114 = scmp.eq.s32.totalorder %s29, 1
      %p115 = por %p113, %p114
      %p116 = scmp.ne.s32.totalorder %s107, %s108
      %p117 = scmp.eq.s32.totalorder %s29, 0
      %p118 = por %p116, %p117
      %p119 = scmp.ne.s32.totalorder %s107, %s108
      %p120 = scmp.eq.s32.totalorder %s30, 1
      %p121 = por %p119, %p120
      %p123 = scmp.ne.s32.totalorder %s108, %s122
      %p124 = scmp.eq.s32.totalorder %s30, 0
      %p125 = por %p123, %p124
      %s126 = ssub.s32 %s24, %s31
      %p127 = scmp.eq.s32.totalorder %s126, 0
      %s129 = sadd.s32 %s128, 1
      %s130 = scalar_select %p127, %s128, %s129
      %p133 = pneg %p127
      %p134 = scmp.eq.s32.totalorder %s24, 1
      %p135 = por %p133, %p134
      %p136 = scmp.ne.s32.totalorder %s128, %s131
      %p137 = scmp.eq.s32.totalorder %s24, 0
      %p138 = por %p136, %p137
      %p139 = scmp.ne.s32.totalorder %s128, %s131
      %p140 = scmp.eq.s32.totalorder %s29, 1
      %p141 = por %p139, %p140
      %p142 = scmp.ne.s32.totalorder %s131, %s132
      %p143 = scmp.eq.s32.totalorder %s29, 0
      %p144 = por %p142, %p143
      %p145 = scmp.ne.s32.totalorder %s131, %s132
      %p146 = scmp.eq.s32.totalorder %s30, 1
      %p147 = por %p145, %p146
      %p149 = scmp.ne.s32.totalorder %s132, %s148
      %p150 = scmp.eq.s32.totalorder %s30, 0
      %p151 = por %p149, %p150
      %s152 = ssub.s32 %s24, %s31
      %p153 = scmp.eq.s32.totalorder %s152, 0
      %s155 = sadd.s32 %s154, 1
      %s156 = scalar_select %p153, %s154, %s155
      %p159 = pneg %p153
      %p160 = scmp.eq.s32.totalorder %s24, 1
      %p161 = por %p159, %p160
      %p162 = scmp.ne.s32.totalorder %s154, %s157
      %p163 = scmp.eq.s32.totalorder %s24, 0
      %p164 = por %p162, %p163
      %p165 = scmp.ne.s32.totalorder %s154, %s157
      %p166 = scmp.eq.s32.totalorder %s29, 1
      %p167 = por %p165, %p166
      %p168 = scmp.ne.s32.totalorder %s157, %s158
      %p169 = scmp.eq.s32.totalorder %s29, 0
      %p170 = por %p168, %p169
      %p171 = scmp.ne.s32.totalorder %s157, %s158
      %p172 = scmp.eq.s32.totalorder %s30, 1
      %p173 = por %p171, %p172
      %p175 = scmp.ne.s32.totalorder %s158, %s174
      %p176 = scmp.eq.s32.totalorder %s30, 0
      %p177 = por %p175, %p176
      %p178 = scmp.le.s32.totalorder 1, %s24
      %p179 = scmp.lt.s32.totalorder %s24, 3
      %p180 = pnand %p178, %p179
      %p181 = pneg %p180
      // Predicated region
      $region9: #{tpu_custom_call.1} parent=5 // pred_check
        _
      $region10: #{tpu_custom_call.1} parent=5 // pred_check_branch
        %183 = sbr.rel (%p180) target = $region12
      $region11: #{tpu_custom_call.1} parent=5 // pred_region
        %s184 = ssub.s32 %s24, 1
        // Predicated region
        $region13: #{tpu_custom_call.1} parent=11 // pred_check
          %p185 = pneg %p97
        $region14: #{tpu_custom_call.1} parent=11 // pred_check_branch
          %187 = sbr.rel (%p185) target = $region16
        $region15: #{tpu_custom_call.1} parent=11 // pred_region
          %s189 = ssub.s32 8192, 8192
          %190 = vsyncadd [#allocation6], %s189
          %s191 = sshll.u32 [#allocation7], 4
          %s192 = int_to_ptr.vmem [resolvable:$true] %s191
          %197 = dma.hbm_to_vmem [thread:$0]  %s2, 8192, %s192, [#allocation6], 256, 256, 16
        $region16: #{tpu_custom_call.1} parent=11 // pred_fallthru
          _
        // Predicated region
        $region17: #{tpu_custom_call.1} parent=11 // pred_check
          %p198 = pneg %p118
        $region18: #{tpu_custom_call.1} parent=11 // pred_check_branch
          %200 = sbr.rel (%p198) target = $region20
        $region19: #{tpu_custom_call.1} parent=11 // pred_region
          _
        $region20: #{tpu_custom_call.1} parent=11 // pred_fallthru
          _
      $region12: #{tpu_custom_call.1} parent=5 // pred_fallthru
        _
      %p201 = scmp.lt.s32.totalorder %s24, 2
      // Predicated region
      $region21: #{tpu_custom_call.1} parent=5 // pred_check
        %p202 = pneg %p201
      $region22: #{tpu_custom_call.1} parent=5 // pred_check_branch
        %204 = sbr.rel (%p202) target = $region24
      $region23: #{tpu_custom_call.1} parent=5 // pred_region
        // Predicated region
        $region25: #{tpu_custom_call.1} parent=23 // pred_check
          %p205 = pneg %p44
        $region26: #{tpu_custom_call.1} parent=23 // pred_check_branch
          %207 = sbr.rel (%p205) target = $region28
        $region27: #{tpu_custom_call.1} parent=23 // pred_region
          %s208 = sand.u32 %s34, 1
          %s209 = scalar_lea.sflag [#allocation3], %s208
          %s210 = sand.u32 %s34, 1
          %s211 = smul.addr %s210, 128
          %s212 = scalar_lea.vmem [#allocation2], %s211
          %s213 = smul.u32 16, %s24
          %s215 = ssub.s32 2048, 2048
          %216 = vsyncadd %s209, %s215
          %s217 = smul.addr %s213, 2
          %s218 = smul.addr %s217, 64
          %s219 = scalar_lea.hbm %s0, %s218
          %s220 = sshll.u32 %s212, 4
          %s221 = int_to_ptr.vmem [resolvable:$true] %s220
          %226 = dma.hbm_to_vmem [thread:$0]  %s219, 2048, %s221, %s209, 128, 128, 8
        $region28: #{tpu_custom_call.1} parent=23 // pred_fallthru
          _
        // Predicated region
        $region29: #{tpu_custom_call.1} parent=23 // pred_check
          %p227 = pneg %p70
        $region30: #{tpu_custom_call.1} parent=23 // pred_check_branch
          %229 = sbr.rel (%p227) target = $region32
        $region31: #{tpu_custom_call.1} parent=23 // pred_region
          %s230 = sand.u32 %s24, 1
          %s231 = scalar_lea.sflag [#allocation6], %s230
          %s232 = sand.u32 %s60, 1
          %s233 = smul.addr %s232, 128
          %s234 = scalar_lea.vmem [#allocation5], %s233
          %s235 = smul.u32 16, %s24
          %s237 = ssub.s32 2048, 2048
          %238 = vsyncadd %s231, %s237
          %s239 = smul.addr %s235, 2
          %s240 = smul.addr %s239, 64
          %s241 = scalar_lea.hbm %s1, %s240
          %s242 = sshll.u32 %s234, 4
          %s243 = int_to_ptr.vmem [resolvable:$true] %s242
          %248 = dma.hbm_to_vmem [thread:$0]  %s241, 2048, %s243, %s231, 128, 128, 8
        $region32: #{tpu_custom_call.1} parent=23 // pred_fallthru
          _
      $region24: #{tpu_custom_call.1} parent=5 // pred_fallthru
        _
      %p249 = scmp.le.s32.totalorder 1, %s24
      %p250 = scmp.lt.s32.totalorder %s24, 3
      %p251 = pnand %p249, %p250
      %p252 = pneg %p251
      // Predicated region
      $region33: #{tpu_custom_call.1} parent=5 // pred_check
        _
      $region34: #{tpu_custom_call.1} parent=5 // pred_check_branch
        %254 = sbr.rel (%p251) target = $region36
      $region35: #{tpu_custom_call.1} parent=5 // pred_region
        %s255 = ssub.s32 %s24, 1
        %s256 = sand.u32 %s37, 1
        %s257 = scalar_lea.sflag [#allocation3], %s256
        %s258 = sand.u32 %s37, 1
        %s259 = smul.addr %s258, 128
        %s260 = scalar_lea.vmem [#allocation2], %s259
        // Predicated region
        $region37: #{tpu_custom_call.1} parent=35 // pred_check
          %p261 = pneg %p50
        $region38: #{tpu_custom_call.1} parent=35 // pred_check_branch
          %263 = sbr.rel (%p261) target = $region40
        $region39: #{tpu_custom_call.1} parent=35 // pred_region
          %264 = dma.done %s257, 2048
        $region40: #{tpu_custom_call.1} parent=35 // pred_fallthru
          _
        %s265 = sand.u32 %s29, 1
        %s266 = scalar_lea.sflag [#allocation6], %s265
        %s267 = sand.u32 %s63, 1
        %s268 = smul.addr %s267, 128
        %s269 = scalar_lea.vmem [#allocation5], %s268
        // Predicated region
        $region41: #{tpu_custom_call.1} parent=35 // pred_check
          %p270 = pneg %p76
        $region42: #{tpu_custom_call.1} parent=35 // pred_check_branch
          %272 = sbr.rel (%p270) target = $region44
        $region43: #{tpu_custom_call.1} parent=35 // pred_region
          %273 = dma.done %s266, 2048
        $region44: #{tpu_custom_call.1} parent=35 // pred_fallthru
          _
        // Predicated region
        $region45: #{tpu_custom_call.1} parent=35 // pred_check
          %p274 = pneg %p97
        $region46: #{tpu_custom_call.1} parent=35 // pred_check_branch
          %276 = sbr.rel (%p274) target = $region48
        $region47: #{tpu_custom_call.1} parent=35 // pred_region
          %277 = dma.done [#allocation6], 8192
        $region48: #{tpu_custom_call.1} parent=35 // pred_fallthru
          _
        %s278 = sand.u32 %s37, 1
        %s279 = scalar_lea.sflag [#allocation3], %s278
        %s280 = sand.u32 %s37, 1
        %s281 = smul.addr %s280, 128
        %s282 = scalar_lea.vmem [#allocation2], %s281
        %p283 = pneg %p50
        %p284 = pneg %p47
        %s285 = sand.u32 %s29, 1
        %s286 = scalar_lea.sflag [#allocation6], %s285
        %s287 = sand.u32 %s63, 1
        %s288 = smul.addr %s287, 128
        %s289 = scalar_lea.vmem [#allocation5], %s288
        %p290 = pneg %p76
        %p291 = pneg %p73
        %p292 = pneg %p97
        %p293 = pneg %p94
        %p294 = pneg %p118
        %p295 = pneg %p115
        %p296 = pneg %p144
        %p297 = pneg %p141
        %s298 = sand.u32 %s131, 1
        %s299 = scalar_lea.sflag [#allocation4], %s298
        %s300 = sand.u32 %s131, 1
        %s301 = smul.addr %s300, 256
        %s302 = scalar_lea.vmem [#allocation8], %s301
        %p303 = pneg %p170
        %p304 = pneg %p167
        %s305 = sand.u32 %s157, 1
        %s306 = scalar_lea.sflag [#allocation10], %s305
        %s307 = sand.u32 %s157, 1
        %s308 = smul.addr %s307, 256
        %s309 = scalar_lea.vmem [#allocation9], %s308
        %s310 = smul.u32 16, %s29
        %s311 = smul.u32 16, %s29
        %s312 = smul.u32 16, %s29
        %s313 = smul.u32 16, %s29
        %v314 = vld [vmem:[%s269] sm:$0xff]
        %v315 = vld [vmem:[%s269 + $0x8] sm:$0xff]
        %v316 = vld [vmem:[%s269 + $0x10] sm:$0xff]
        %v317 = vld [vmem:[%s269 + $0x18] sm:$0xff]
        %v318 = vld [vmem:[%s269 + $0x20] sm:$0xff]
        %v319 = vld [vmem:[%s269 + $0x28] sm:$0xff]
        %v320 = vld [vmem:[%s269 + $0x30] sm:$0xff]
        %v321 = vld [vmem:[%s269 + $0x38] sm:$0xff]
        %v322 = vld [vmem:[%s269 + $0x40] sm:$0xff]
        %v323 = vld [vmem:[%s269 + $0x48] sm:$0xff]
        %v324 = vld [vmem:[%s269 + $0x50] sm:$0xff]
        %v325 = vld [vmem:[%s269 + $0x58] sm:$0xff]
        %v326 = vld [vmem:[%s269 + $0x60] sm:$0xff]
        %v327 = vld [vmem:[%s269 + $0x68] sm:$0xff]
        %v328 = vld [vmem:[%s269 + $0x70] sm:$0xff]
        %v329 = vld [vmem:[%s269 + $0x78] sm:$0xff]
        %v330 = vld [vmem:[%s260] sm:$0xff]
        %v331 = vld [vmem:[%s260 + $0x8] sm:$0xff]
        %v332 = vld [vmem:[%s260 + $0x10] sm:$0xff]
        %v333 = vld [vmem:[%s260 + $0x18] sm:$0xff]
        %v334 = vld [vmem:[%s260 + $0x20] sm:$0xff]
        %v335 = vld [vmem:[%s260 + $0x28] sm:$0xff]
        %v336 = vld [vmem:[%s260 + $0x30] sm:$0xff]
        %v337 = vld [vmem:[%s260 + $0x38] sm:$0xff]
        %v338 = vld [vmem:[%s260 + $0x40] sm:$0xff]
        %v339 = vld [vmem:[%s260 + $0x48] sm:$0xff]
        %v340 = vld [vmem:[%s260 + $0x50] sm:$0xff]
        %v341 = vld [vmem:[%s260 + $0x58] sm:$0xff]
        %v342 = vld [vmem:[%s260 + $0x60] sm:$0xff]
        %v343 = vld [vmem:[%s260 + $0x68] sm:$0xff]
        %v344 = vld [vmem:[%s260 + $0x70] sm:$0xff]
        %v345 = vld [vmem:[%s260 + $0x78] sm:$0xff]
        %v346 = vunpack.c.l.bf16 %v330
        %v347 = vunpack.c.h.bf16 %v330
        %v348 = vunpack.c.l.bf16 %v331
        %v349 = vunpack.c.h.bf16 %v331
        %v350 = vunpack.c.l.bf16 %v332
        %v351 = vunpack.c.h.bf16 %v332
        %v352 = vunpack.c.l.bf16 %v333
        %v353 = vunpack.c.h.bf16 %v333
        %v354 = vunpack.c.l.bf16 %v334
        %v355 = vunpack.c.h.bf16 %v334
        %v356 = vunpack.c.l.bf16 %v335
        %v357 = vunpack.c.h.bf16 %v335
        %v358 = vunpack.c.l.bf16 %v336
        %v359 = vunpack.c.h.bf16 %v336
        %v360 = vunpack.c.l.bf16 %v337
        %v361 = vunpack.c.h.bf16 %v337
        %v362 = vunpack.c.l.bf16 %v338
        %v363 = vunpack.c.h.bf16 %v338
        %v364 = vunpack.c.l.bf16 %v339
        %v365 = vunpack.c.h.bf16 %v339
        %v366 = vunpack.c.l.bf16 %v340
        %v367 = vunpack.c.h.bf16 %v340
        %v368 = vunpack.c.l.bf16 %v341
        %v369 = vunpack.c.h.bf16 %v341
        %v370 = vunpack.c.l.bf16 %v342
        %v371 = vunpack.c.h.bf16 %v342
        %v372 = vunpack.c.l.bf16 %v343
        %v373 = vunpack.c.h.bf16 %v343
        %v374 = vunpack.c.l.bf16 %v344
        %v375 = vunpack.c.h.bf16 %v344
        %v376 = vunpack.c.l.bf16 %v345
        %v377 = vunpack.c.h.bf16 %v345
        %v378 = vunpack.c.l.bf16 %v314
        %v379 = vunpack.c.h.bf16 %v314
        %v380 = vunpack.c.l.bf16 %v315
        %v381 = vunpack.c.h.bf16 %v315
        %v382 = vunpack.c.l.bf16 %v316
        %v383 = vunpack.c.h.bf16 %v316
        %v384 = vunpack.c.l.bf16 %v317
        %v385 = vunpack.c.h.bf16 %v317
        %v386 = vunpack.c.l.bf16 %v318
        %v387 = vunpack.c.h.bf16 %v318
        %v388 = vunpack.c.l.bf16 %v319
        %v389 = vunpack.c.h.bf16 %v319
        %v390 = vunpack.c.l.bf16 %v320
        %v391 = vunpack.c.h.bf16 %v320
        %v392 = vunpack.c.l.bf16 %v321
        %v393 = vunpack.c.h.bf16 %v321
        %v394 = vunpack.c.l.bf16 %v322
        %v395 = vunpack.c.h.bf16 %v322
        %v396 = vunpack.c.l.bf16 %v323
        %v397 = vunpack.c.h.bf16 %v323
        %v398 = vunpack.c.l.bf16 %v324
        %v399 = vunpack.c.h.bf16 %v324
        %v400 = vunpack.c.l.bf16 %v325
        %v401 = vunpack.c.h.bf16 %v325
        %v402 = vunpack.c.l.bf16 %v326
        %v403 = vunpack.c.h.bf16 %v326
        %v404 = vunpack.c.l.bf16 %v327
        %v405 = vunpack.c.h.bf16 %v327
        %v406 = vunpack.c.l.bf16 %v328
        %v407 = vunpack.c.h.bf16 %v328
        %v408 = vunpack.c.l.bf16 %v329
        %v409 = vunpack.c.h.bf16 %v329
        %v410 = vadd.f32 %v346, %v378
        %v411 = vadd.f32 %v347, %v379
        %v412 = vadd.f32 %v348, %v380
        %v413 = vadd.f32 %v349, %v381
        %v414 = vadd.f32 %v350, %v382
        %v415 = vadd.f32 %v351, %v383
        %v416 = vadd.f32 %v352, %v384
        %v417 = vadd.f32 %v353, %v385
        %v418 = vadd.f32 %v354, %v386
        %v419 = vadd.f32 %v355, %v387
        %v420 = vadd.f32 %v356, %v388
        %v421 = vadd.f32 %v357, %v389
        %v422 = vadd.f32 %v358, %v390
        %v423 = vadd.f32 %v359, %v391
        %v424 = vadd.f32 %v360, %v392
        %v425 = vadd.f32 %v361, %v393
        %v426 = vadd.f32 %v362, %v394
        %v427 = vadd.f32 %v363, %v395
        %v428 = vadd.f32 %v364, %v396
        %v429 = vadd.f32 %v365, %v397
        %v430 = vadd.f32 %v366, %v398
        %v431 = vadd.f32 %v367, %v399
        %v432 = vadd.f32 %v368, %v400
        %v433 = vadd.f32 %v369, %v401
        %v434 = vadd.f32 %v370, %v402
        %v435 = vadd.f32 %v371, %v403
        %v436 = vadd.f32 %v372, %v404
        %v437 = vadd.f32 %v373, %v405
        %v438 = vadd.f32 %v374, %v406
        %v439 = vadd.f32 %v375, %v407
        %v440 = vadd.f32 %v376, %v408
        %v441 = vadd.f32 %v377, %v409
        %v442 = vmul.f32 %v410, 0.5
        %v443 = vmul.f32 %v411, 0.5
        %v444 = vmul.f32 %v412, 0.5
        %v445 = vmul.f32 %v413, 0.5
        %v446 = vmul.f32 %v414, 0.5
        %v447 = vmul.f32 %v415, 0.5
        %v448 = vmul.f32 %v416, 0.5
        %v449 = vmul.f32 %v417, 0.5
        %v450 = vmul.f32 %v418, 0.5
        %v451 = vmul.f32 %v419, 0.5
        %v452 = vmul.f32 %v420, 0.5
        %v453 = vmul.f32 %v421, 0.5
        %v454 = vmul.f32 %v422, 0.5
        %v455 = vmul.f32 %v423, 0.5
        %v456 = vmul.f32 %v424, 0.5
        %v457 = vmul.f32 %v425, 0.5
        %v458 = vmul.f32 %v426, 0.5
        %v459 = vmul.f32 %v427, 0.5
        %v460 = vmul.f32 %v428, 0.5
        %v461 = vmul.f32 %v429, 0.5
        %v462 = vmul.f32 %v430, 0.5
        %v463 = vmul.f32 %v431, 0.5
        %v464 = vmul.f32 %v432, 0.5
        %v465 = vmul.f32 %v433, 0.5
        %v466 = vmul.f32 %v434, 0.5
        %v467 = vmul.f32 %v435, 0.5
        %v468 = vmul.f32 %v436, 0.5
        %v469 = vmul.f32 %v437, 0.5
        %v470 = vmul.f32 %v438, 0.5
        %v471 = vmul.f32 %v439, 0.5
        %v472 = vmul.f32 %v440, 0.5
        %v473 = vmul.f32 %v441, 0.5
        %v474 = vpack.c.bf16 %v444, %v442
        %v475 = vpack.c.bf16 %v445, %v443
        %v476 = vpack.c.bf16 %v448, %v446
        %v477 = vpack.c.bf16 %v449, %v447
        %v478 = vpack.c.bf16 %v452, %v450
        %v479 = vpack.c.bf16 %v453, %v451
        %v480 = vpack.c.bf16 %v456, %v454
        %v481 = vpack.c.bf16 %v457, %v455
        %v482 = vpack.c.bf16 %v460, %v458
        %v483 = vpack.c.bf16 %v461, %v459
        %v484 = vpack.c.bf16 %v464, %v462
        %v485 = vpack.c.bf16 %v465, %v463
        %v486 = vpack.c.bf16 %v468, %v466
        %v487 = vpack.c.bf16 %v469, %v467
        %v488 = vpack.c.bf16 %v472, %v470
        %v489 = vpack.c.bf16 %v473, %v471
        %v506 = vunpack.c.l.b16 %v314
        %v507 = vunpack.c.h.b16 %v314
        %v508 = vunpack.c.l.b16 %v315
        %v509 = vunpack.c.h.b16 %v315
        %v510 = vunpack.c.l.b16 %v316
        %v511 = vunpack.c.h.b16 %v316
        %v512 = vunpack.c.l.b16 %v317
        %v513 = vunpack.c.h.b16 %v317
        %v514 = vunpack.c.l.b16 %v318
        %v515 = vunpack.c.h.b16 %v318
        %v516 = vunpack.c.l.b16 %v319
        %v517 = vunpack.c.h.b16 %v319
        %v518 = vunpack.c.l.b16 %v320
        %v519 = vunpack.c.h.b16 %v320
        %v520 = vunpack.c.l.b16 %v321
        %v521 = vunpack.c.h.b16 %v321
        %v522 = vunpack.c.l.b16 %v322
        %v523 = vunpack.c.h.b16 %v322
        %v524 = vunpack.c.l.b16 %v323
        %v525 = vunpack.c.h.b16 %v323
        %v526 = vunpack.c.l.b16 %v324
        %v527 = vunpack.c.h.b16 %v324
        %v528 = vunpack.c.l.b16 %v325
        %v529 = vunpack.c.h.b16 %v325
        %v530 = vunpack.c.l.b16 %v326
        %v531 = vunpack.c.h.b16 %v326
        %v532 = vunpack.c.l.b16 %v327
        %v533 = vunpack.c.h.b16 %v327
        %v534 = vunpack.c.l.b16 %v328
        %v535 = vunpack.c.h.b16 %v328
        %v536 = vunpack.c.l.b16 %v329
        %v537 = vunpack.c.h.b16 %v329
        %v538 = vpack.c.b16 %v508, %v506
        %v539 = vpack.c.b16 %v509, %v507
        %v540 = vpack.c.b16 %v512, %v510
        %v541 = vpack.c.b16 %v513, %v511
        %v542 = vpack.c.b16 %v516, %v514
        %v543 = vpack.c.b16 %v517, %v515
        %v544 = vpack.c.b16 %v520, %v518
        %v545 = vpack.c.b16 %v521, %v519
        %v546 = vpack.c.b16 %v524, %v522
        %v547 = vpack.c.b16 %v525, %v523
        %v548 = vpack.c.b16 %v528, %v526
        %v549 = vpack.c.b16 %v529, %v527
        %v550 = vpack.c.b16 %v532, %v530
        %v551 = vpack.c.b16 %v533, %v531
        %v552 = vpack.c.b16 %v536, %v534
        %v553 = vpack.c.b16 %v537, %v535
        %v570 = vld [vmem:[#allocation7] sm:$0xff]
        %v571 = vld [vmem:[#allocation7 + $0x8] sm:$0xff]
        %v572 = vld [vmem:[#allocation7 + $0x10] sm:$0xff]
        %v573 = vld [vmem:[#allocation7 + $0x18] sm:$0xff]
        %v574 = vld [vmem:[#allocation7 + $0x20] sm:$0xff]
        %v575 = vld [vmem:[#allocation7 + $0x28] sm:$0xff]
        %v576 = vld [vmem:[#allocation7 + $0x30] sm:$0xff]
        %v577 = vld [vmem:[#allocation7 + $0x38] sm:$0xff]
        %v578 = vld [vmem:[#allocation7 + $0x40] sm:$0xff]
        %v579 = vld [vmem:[#allocation7 + $0x48] sm:$0xff]
        %v580 = vld [vmem:[#allocation7 + $0x50] sm:$0xff]
        %v581 = vld [vmem:[#allocation7 + $0x58] sm:$0xff]
        %v582 = vld [vmem:[#allocation7 + $0x60] sm:$0xff]
        %v583 = vld [vmem:[#allocation7 + $0x68] sm:$0xff]
        %v584 = vld [vmem:[#allocation7 + $0x70] sm:$0xff]
        %v585 = vld [vmem:[#allocation7 + $0x78] sm:$0xff]
        %v586 = vld [vmem:[#allocation7 + $0x80] sm:$0xff]
        %v587 = vld [vmem:[#allocation7 + $0x88] sm:$0xff]
        %v588 = vld [vmem:[#allocation7 + $0x90] sm:$0xff]
        %v589 = vld [vmem:[#allocation7 + $0x98] sm:$0xff]
        %v590 = vld [vmem:[#allocation7 + $0xa0] sm:$0xff]
        %v591 = vld [vmem:[#allocation7 + $0xa8] sm:$0xff]
        %v592 = vld [vmem:[#allocation7 + $0xb0] sm:$0xff]
        %v593 = vld [vmem:[#allocation7 + $0xb8] sm:$0xff]
        %v594 = vld [vmem:[#allocation7 + $0xc0] sm:$0xff]
        %v595 = vld [vmem:[#allocation7 + $0xc8] sm:$0xff]
        %v596 = vld [vmem:[#allocation7 + $0xd0] sm:$0xff]
        %v597 = vld [vmem:[#allocation7 + $0xd8] sm:$0xff]
        %v598 = vld [vmem:[#allocation7 + $0xe0] sm:$0xff]
        %v599 = vld [vmem:[#allocation7 + $0xe8] sm:$0xff]
        %v600 = vld [vmem:[#allocation7 + $0xf0] sm:$0xff]
        %v601 = vld [vmem:[#allocation7 + $0xf8] sm:$0xff]
        %v602 = vld [vmem:[#allocation7 + $0x100] sm:$0xff]
        %v603 = vld [vmem:[#allocation7 + $0x108] sm:$0xff]
        %v604 = vld [vmem:[#allocation7 + $0x110] sm:$0xff]
        %v605 = vld [vmem:[#allocation7 + $0x118] sm:$0xff]
        %v606 = vld [vmem:[#allocation7 + $0x120] sm:$0xff]
        %v607 = vld [vmem:[#allocation7 + $0x128] sm:$0xff]
        %v608 = vld [vmem:[#allocation7 + $0x130] sm:$0xff]
        %v609 = vld [vmem:[#allocation7 + $0x138] sm:$0xff]
        %v610 = vld [vmem:[#allocation7 + $0x140] sm:$0xff]
        %v611 = vld [vmem:[#allocation7 + $0x148] sm:$0xff]
        %v612 = vld [vmem:[#allocation7 + $0x150] sm:$0xff]
        %v613 = vld [vmem:[#allocation7 + $0x158] sm:$0xff]
        %v614 = vld [vmem:[#allocation7 + $0x160] sm:$0xff]
        %v615 = vld [vmem:[#allocation7 + $0x168] sm:$0xff]
        %v616 = vld [vmem:[#allocation7 + $0x170] sm:$0xff]
        %v617 = vld [vmem:[#allocation7 + $0x178] sm:$0xff]
        %v618 = vld [vmem:[#allocation7 + $0x180] sm:$0xff]
        %v619 = vld [vmem:[#allocation7 + $0x188] sm:$0xff]
        %v620 = vld [vmem:[#allocation7 + $0x190] sm:$0xff]
        %v621 = vld [vmem:[#allocation7 + $0x198] sm:$0xff]
        %v622 = vld [vmem:[#allocation7 + $0x1a0] sm:$0xff]
        %v623 = vld [vmem:[#allocation7 + $0x1a8] sm:$0xff]
        %v624 = vld [vmem:[#allocation7 + $0x1b0] sm:$0xff]
        %v625 = vld [vmem:[#allocation7 + $0x1b8] sm:$0xff]
        %v626 = vld [vmem:[#allocation7 + $0x1c0] sm:$0xff]
        %v627 = vld [vmem:[#allocation7 + $0x1c8] sm:$0xff]
        %v628 = vld [vmem:[#allocation7 + $0x1d0] sm:$0xff]
        %v629 = vld [vmem:[#allocation7 + $0x1d8] sm:$0xff]
        %v630 = vld [vmem:[#allocation7 + $0x1e0] sm:$0xff]
        %v631 = vld [vmem:[#allocation7 + $0x1e8] sm:$0xff]
        %v632 = vld [vmem:[#allocation7 + $0x1f0] sm:$0xff]
        %v633 = vld [vmem:[#allocation7 + $0x1f8] sm:$0xff]
        %v634 = vld [vmem:[%s3] sm:$0xf]
        %v636 = vlaneseq
        %v637 = vshrl.u32 %v636, 7
        %v638 = vsub.s32 0, %v637
        %v639 = vrot.slane %v634, %v638
        %v640 = vlaneseq
        %v641 = vshrl.u32 %v640, 7
        %v642 = vsub.s32 1, %v641
        %v643 = vrot.slane %v634, %v642
        %v644 = vlaneseq
        %v645 = vshrl.u32 %v644, 7
        %v646 = vsub.s32 2, %v645
        %v647 = vrot.slane %v634, %v646
        %v648 = vlaneseq
        %v649 = vshrl.u32 %v648, 7
        %v650 = vsub.s32 3, %v649
        %v651 = vrot.slane %v634, %v650
        %v720 = vunpack.c.l.b16 %v570
        %v721 = vunpack.c.h.b16 %v570
        %v722 = vunpack.c.l.b16 %v571
        %v723 = vunpack.c.h.b16 %v571
        %v724 = vunpack.c.l.b16 %v572
        %v725 = vunpack.c.h.b16 %v572
        %v726 = vunpack.c.l.b16 %v573
        %v727 = vunpack.c.h.b16 %v573
        %v728 = vunpack.c.l.b16 %v574
        %v729 = vunpack.c.h.b16 %v574
        %v730 = vunpack.c.l.b16 %v575
        %v731 = vunpack.c.h.b16 %v575
        %v732 = vunpack.c.l.b16 %v576
        %v733 = vunpack.c.h.b16 %v576
        %v734 = vunpack.c.l.b16 %v577
        %v735 = vunpack.c.h.b16 %v577
        %v736 = vunpack.c.l.b16 %v578
        %v737 = vunpack.c.h.b16 %v578
        %v738 = vunpack.c.l.b16 %v579
        %v739 = vunpack.c.h.b16 %v579
        %v740 = vunpack.c.l.b16 %v580
        %v741 = vunpack.c.h.b16 %v580
        %v742 = vunpack.c.l.b16 %v581
        %v743 = vunpack.c.h.b16 %v581
        %v744 = vunpack.c.l.b16 %v582
        %v745 = vunpack.c.h.b16 %v582
        %v746 = vunpack.c.l.b16 %v583
        %v747 = vunpack.c.h.b16 %v583
        %v748 = vunpack.c.l.b16 %v584
        %v749 = vunpack.c.h.b16 %v584
        %v750 = vunpack.c.l.b16 %v585
        %v751 = vunpack.c.h.b16 %v585
        %v752 = vunpack.c.l.b16 %v586
        %v753 = vunpack.c.h.b16 %v586
        %v754 = vunpack.c.l.b16 %v587
        %v755 = vunpack.c.h.b16 %v587
        %v756 = vunpack.c.l.b16 %v588
        %v757 = vunpack.c.h.b16 %v588
        %v758 = vunpack.c.l.b16 %v589
        %v759 = vunpack.c.h.b16 %v589
        %v760 = vunpack.c.l.b16 %v590
        %v761 = vunpack.c.h.b16 %v590
        %v762 = vunpack.c.l.b16 %v591
        %v763 = vunpack.c.h.b16 %v591
        %v764 = vunpack.c.l.b16 %v592
        %v765 = vunpack.c.h.b16 %v592
        %v766 = vunpack.c.l.b16 %v593
        %v767 = vunpack.c.h.b16 %v593
        %v768 = vunpack.c.l.b16 %v594
        %v769 = vunpack.c.h.b16 %v594
        %v770 = vunpack.c.l.b16 %v595
        %v771 = vunpack.c.h.b16 %v595
        %v772 = vunpack.c.l.b16 %v596
        %v773 = vunpack.c.h.b16 %v596
        %v774 = vunpack.c.l.b16 %v597
        %v775 = vunpack.c.h.b16 %v597
        %v776 = vunpack.c.l.b16 %v598
        %v777 = vunpack.c.h.b16 %v598
        %v778 = vunpack.c.l.b16 %v599
        %v779 = vunpack.c.h.b16 %v599
        %v780 = vunpack.c.l.b16 %v600
        %v781 = vunpack.c.h.b16 %v600
        %v782 = vunpack.c.l.b16 %v601
        %v783 = vunpack.c.h.b16 %v601
        %v784 = vunpack.c.l.b16 %v602
        %v785 = vunpack.c.h.b16 %v602
        %v786 = vunpack.c.l.b16 %v603
        %v787 = vunpack.c.h.b16 %v603
        %v788 = vunpack.c.l.b16 %v604
        %v789 = vunpack.c.h.b16 %v604
        %v790 = vunpack.c.l.b16 %v605
        %v791 = vunpack.c.h.b16 %v605
        %v792 = vunpack.c.l.b16 %v606
        %v793 = vunpack.c.h.b16 %v606
        %v794 = vunpack.c.l.b16 %v607
        %v795 = vunpack.c.h.b16 %v607
        %v796 = vunpack.c.l.b16 %v608
        %v797 = vunpack.c.h.b16 %v608
        %v798 = vunpack.c.l.b16 %v609
        %v799 = vunpack.c.h.b16 %v609
        %v800 = vunpack.c.l.b16 %v610
        %v801 = vunpack.c.h.b16 %v610
        %v802 = vunpack.c.l.b16 %v611
        %v803 = vunpack.c.h.b16 %v611
        %v804 = vunpack.c.l.b16 %v612
        %v805 = vunpack.c.h.b16 %v612
        %v806 = vunpack.c.l.b16 %v613
        %v807 = vunpack.c.h.b16 %v613
        %v808 = vunpack.c.l.b16 %v614
        %v809 = vunpack.c.h.b16 %v614
        %v810 = vunpack.c.l.b16 %v615
        %v811 = vunpack.c.h.b16 %v615
        %v812 = vunpack.c.l.b16 %v616
        %v813 = vunpack.c.h.b16 %v616
        %v814 = vunpack.c.l.b16 %v617
        %v815 = vunpack.c.h.b16 %v617
        %v816 = vunpack.c.l.b16 %v618
        %v817 = vunpack.c.h.b16 %v618
        %v818 = vunpack.c.l.b16 %v619
        %v819 = vunpack.c.h.b16 %v619
        %v820 = vunpack.c.l.b16 %v620
        %v821 = vunpack.c.h.b16 %v620
        %v822 = vunpack.c.l.b16 %v621
        %v823 = vunpack.c.h.b16 %v621
        %v824 = vunpack.c.l.b16 %v622
        %v825 = vunpack.c.h.b16 %v622
        %v826 = vunpack.c.l.b16 %v623
        %v827 = vunpack.c.h.b16 %v623
        %v828 = vunpack.c.l.b16 %v624
        %v829 = vunpack.c.h.b16 %v624
        %v830 = vunpack.c.l.b16 %v625
        %v831 = vunpack.c.h.b16 %v625
        %v832 = vunpack.c.l.b16 %v626
        %v833 = vunpack.c.h.b16 %v626
        %v834 = vunpack.c.l.b16 %v627
        %v835 = vunpack.c.h.b16 %v627
        %v836 = vunpack.c.l.b16 %v628
        %v837 = vunpack.c.h.b16 %v628
        %v838 = vunpack.c.l.b16 %v629
        %v839 = vunpack.c.h.b16 %v629
        %v840 = vunpack.c.l.b16 %v630
        %v841 = vunpack.c.h.b16 %v630
        %v842 = vunpack.c.l.b16 %v631
        %v843 = vunpack.c.h.b16 %v631
        %v844 = vunpack.c.l.b16 %v632
        %v845 = vunpack.c.h.b16 %v632
        %v846 = vunpack.c.l.b16 %v633
        %v847 = vunpack.c.h.b16 %v633
        %v848 = vpack.c.b16 %v724, %v720
        %v849 = vpack.c.b16 %v725, %v721
        %v850 = vpack.c.b16 %v726, %v722
        %v851 = vpack.c.b16 %v727, %v723
        %v852 = vpack.c.b16 %v732, %v728
        %v853 = vpack.c.b16 %v733, %v729
        %v854 = vpack.c.b16 %v734, %v730
        %v855 = vpack.c.b16 %v735, %v731
        %v856 = vpack.c.b16 %v740, %v736
        %v857 = vpack.c.b16 %v741, %v737
        %v858 = vpack.c.b16 %v742, %v738
        %v859 = vpack.c.b16 %v743, %v739
        %v860 = vpack.c.b16 %v748, %v744
        %v861 = vpack.c.b16 %v749, %v745
        %v862 = vpack.c.b16 %v750, %v746
        %v863 = vpack.c.b16 %v751, %v747
        %v864 = vpack.c.b16 %v756, %v752
        %v865 = vpack.c.b16 %v757, %v753
        %v866 = vpack.c.b16 %v758, %v754
        %v867 = vpack.c.b16 %v759, %v755
        %v868 = vpack.c.b16 %v764, %v760
        %v869 = vpack.c.b16 %v765, %v761
        %v870 = vpack.c.b16 %v766, %v762
        %v871 = vpack.c.b16 %v767, %v763
        %v872 = vpack.c.b16 %v772, %v768
        %v873 = vpack.c.b16 %v773, %v769
        %v874 = vpack.c.b16 %v774, %v770
        %v875 = vpack.c.b16 %v775, %v771
        %v876 = vpack.c.b16 %v780, %v776
        %v877 = vpack.c.b16 %v781, %v777
        %v878 = vpack.c.b16 %v782, %v778
        %v879 = vpack.c.b16 %v783, %v779
        %v880 = vpack.c.b16 %v788, %v784
        %v881 = vpack.c.b16 %v789, %v785
        %v882 = vpack.c.b16 %v790, %v786
        %v883 = vpack.c.b16 %v791, %v787
        %v884 = vpack.c.b16 %v796, %v792
        %v885 = vpack.c.b16 %v797, %v793
        %v886 = vpack.c.b16 %v798, %v794
        %v887 = vpack.c.b16 %v799, %v795
        %v888 = vpack.c.b16 %v804, %v800
        %v889 = vpack.c.b16 %v805, %v801
        %v890 = vpack.c.b16 %v806, %v802
        %v891 = vpack.c.b16 %v807, %v803
        %v892 = vpack.c.b16 %v812, %v808
        %v893 = vpack.c.b16 %v813, %v809
        %v894 = vpack.c.b16 %v814, %v810
        %v895 = vpack.c.b16 %v815, %v811
        %v896 = vpack.c.b16 %v820, %v816
        %v897 = vpack.c.b16 %v821, %v817
        %v898 = vpack.c.b16 %v822, %v818
        %v899 = vpack.c.b16 %v823, %v819
        %v900 = vpack.c.b16 %v828, %v824
        %v901 = vpack.c.b16 %v829, %v825
        %v902 = vpack.c.b16 %v830, %v826
        %v903 = vpack.c.b16 %v831, %v827
        %v904 = vpack.c.b16 %v836, %v832
        %v905 = vpack.c.b16 %v837, %v833
        %v906 = vpack.c.b16 %v838, %v834
        %v907 = vpack.c.b16 %v839, %v835
        %v908 = vpack.c.b16 %v844, %v840
        %v909 = vpack.c.b16 %v845, %v841
        %v910 = vpack.c.b16 %v846, %v842
        %v911 = vpack.c.b16 %v847, %v843
        %976 = vmatprep.subr.bf16.mxu0 %v849
        %977 = vmatpush1.bf16.msra.mxu0 %v848
        %978 = vmatprep.subr.bf16.mxu0 %v853
        %979 = vmatpush1.bf16.msra.mxu0 %v852
        %980 = vmatprep.subr.bf16.mxu0 %v857
        %981 = vmatpush1.bf16.msra.mxu0 %v856
        %982 = vmatprep.subr.bf16.mxu0 %v861
        %983 = vmatpush1.bf16.msra.mxu0 %v860
        %984 = vmatprep.subr.bf16.mxu0 %v865
        %985 = vmatpush1.bf16.msra.mxu0 %v864
        %986 = vmatprep.subr.bf16.mxu0 %v869
        %987 = vmatpush1.bf16.msra.mxu0 %v868
        %988 = vmatprep.subr.bf16.mxu0 %v873
        %989 = vmatpush1.bf16.msra.mxu0 %v872
        %990 = vmatprep.subr.bf16.mxu0 %v877
        %991 = vmatpush1.bf16.msra.mxu0 %v876
        %992 = vmatprep.subr.bf16.mxu0 %v881
        %993 = vmatpush1.bf16.msra.mxu0 %v880
        %994 = vmatprep.subr.bf16.mxu0 %v885
        %995 = vmatpush1.bf16.msra.mxu0 %v884
        %996 = vmatprep.subr.bf16.mxu0 %v889
        %997 = vmatpush1.bf16.msra.mxu0 %v888
        %998 = vmatprep.subr.bf16.mxu0 %v893
        %999 = vmatpush1.bf16.msra.mxu0 %v892
        %1000 = vmatprep.subr.bf16.mxu0 %v897
        %1001 = vmatpush1.bf16.msra.mxu0 %v896
        %1002 = vmatprep.subr.bf16.mxu0 %v901
        %1003 = vmatpush1.bf16.msra.mxu0 %v900
        %1004 = vmatprep.subr.bf16.mxu0 %v905
        %1005 = vmatpush1.bf16.msra.mxu0 %v904
        %1006 = vmatprep.subr.bf16.mxu0 %v909
        %1007 = vmatpush1.bf16.msra.mxu0 %v908
        %1008 = vmatprep.mubr.bf16.mxu0 %v475
        %1009 = vmatmul.mubr.bf16.gmra.mrb[0].mxu0 %v474
        %v1010 = vpop.f32.mrb[0].mxu0
        %v1011 = vadd.f32 %v639, %v1010
        %v1012 = vpop.f32.mrb[0].mxu0
        %v1013 = vadd.f32 %v643, %v1012
        %v1014 = vpop.f32.mrb[0].mxu0
        %v1015 = vadd.f32 %v639, %v1014
        %v1016 = vpop.f32.mrb[0].mxu0
        %v1017 = vadd.f32 %v643, %v1016
        %1018 = vmatprep.mubr.bf16.mxu0 %v477
        %1019 = vmatmul.mubr.bf16.gmra.mrb[0].mxu0 %v476
        %v1020 = vpop.f32.mrb[0].mxu0
        %v1021 = vadd.f32 %v639, %v1020
        %v1022 = vpop.f32.mrb[0].mxu0
        %v1023 = vadd.f32 %v643, %v1022
        %v1024 = vpop.f32.mrb[0].mxu0
        %v1025 = vadd.f32 %v639, %v1024
        %v1026 = vpop.f32.mrb[0].mxu0
        %v1027 = vadd.f32 %v643, %v1026
        %1028 = vmatprep.mubr.bf16.mxu0 %v479
        %1029 = vmatmul.mubr.bf16.gmra.mrb[0].mxu0 %v478
        %v1030 = vpop.f32.mrb[0].mxu0
        %v1031 = vadd.f32 %v639, %v1030
        %v1032 = vpop.f32.mrb[0].mxu0
        %v1033 = vadd.f32 %v643, %v1032
        %v1034 = vpop.f32.mrb[0].mxu0
        %v1035 = vadd.f32 %v639, %v1034
        %v1036 = vpop.f32.mrb[0].mxu0
        %v1037 = vadd.f32 %v643, %v1036
        %1038 = vmatprep.mubr.bf16.mxu0 %v481
        %1039 = vmatmul.mubr.bf16.gmra.mrb[0].mxu0 %v480
        %v1040 = vpop.f32.mrb[0].mxu0
        %v1041 = vadd.f32 %v639, %v1040
        %v1042 = vpop.f32.mrb[0].mxu0
        %v1043 = vadd.f32 %v643, %v1042
        %v1044 = vpop.f32.mrb[0].mxu0
        %v1045 = vadd.f32 %v639, %v1044
        %v1046 = vpop.f32.mrb[0].mxu0
        %v1047 = vadd.f32 %v643, %v1046
        %1048 = vmatprep.mubr.bf16.mxu0 %v483
        %1049 = vmatmul.mubr.bf16.gmra.mrb[0].mxu0 %v482
        %v1050 = vpop.f32.mrb[0].mxu0
        %v1051 = vadd.f32 %v639, %v1050
        %v1052 = vpop.f32.mrb[0].mxu0
        %v1053 = vadd.f32 %v643, %v1052
        %v1054 = vpop.f32.mrb[0].mxu0
        %v1055 = vadd.f32 %v639, %v1054
        %v1056 = vpop.f32.mrb[0].mxu0
        %v1057 = vadd.f32 %v643, %v1056
        %1058 = vmatprep.mubr.bf16.mxu0 %v485
        %1059 = vmatmul.mubr.bf16.gmra.mrb[0].mxu0 %v484
        %v1060 = vpop.f32.mrb[0].mxu0
        %v1061 = vadd.f32 %v639, %v1060
        %v1062 = vpop.f32.mrb[0].mxu0
        %v1063 = vadd.f32 %v643, %v1062
        %v1064 = vpop.f32.mrb[0].mxu0
        %v1065 = vadd.f32 %v639, %v1064
        %v1066 = vpop.f32.mrb[0].mxu0
        %v1067 = vadd.f32 %v643, %v1066
        %1068 = vmatprep.mubr.bf16.mxu0 %v487
        %1069 = vmatmul.mubr.bf16.gmra.mrb[0].mxu0 %v486
        %v1070 = vpop.f32.mrb[0].mxu0
        %v1071 = vadd.f32 %v639, %v1070
        %v1072 = vpop.f32.mrb[0].mxu0
        %v1073 = vadd.f32 %v643, %v1072
        %v1074 = vpop.f32.mrb[0].mxu0
        %v1075 = vadd.f32 %v639, %v1074
        %v1076 = vpop.f32.mrb[0].mxu0
        %v1077 = vadd.f32 %v643, %v1076
        %1078 = vmatprep.mubr.bf16.mxu0 %v489
        %1079 = vmatmul.mubr.bf16.gmra.mrb[0].mxu0 %v488
        %v1080 = vpop.f32.mrb[0].mxu0
        %v1081 = vadd.f32 %v639, %v1080
        %v1082 = vpop.f32.mrb[0].mxu0
        %v1083 = vadd.f32 %v643, %v1082
        %v1084 = vpop.f32.mrb[0].mxu0
        %v1085 = vadd.f32 %v639, %v1084
        %v1086 = vpop.f32.mrb[0].mxu0
        %v1087 = vadd.f32 %v643, %v1086
        %1088 = vmatprep.mubr.bf16.mxu0 %v539
        %1089 = vmatmul.mubr.bf16.gmra.mrb[0].mxu0 %v538
        %v1090 = vpop.f32.mrb[0].mxu0
        %v1091 = vadd.f32 %v639, %v1090
        %v1092 = vpop.f32.mrb[0].mxu0
        %v1093 = vadd.f32 %v643, %v1092
        %v1094 = vpop.f32.mrb[0].mxu0
        %v1095 = vadd.f32 %v639, %v1094
        %v1096 = vpop.f32.mrb[0].mxu0
        %v1097 = vadd.f32 %v643, %v1096
        %1098 = vmatprep.mubr.bf16.mxu0 %v541
        %1099 = vmatmul.mubr.bf16.gmra.mrb[0].mxu0 %v540
        %v1100 = vpop.f32.mrb[0].mxu0
        %v1101 = vadd.f32 %v639, %v1100
        %v1102 = vpop.f32.mrb[0].mxu0
        %v1103 = vadd.f32 %v643, %v1102
        %v1104 = vpop.f32.mrb[0].mxu0
        %v1105 = vadd.f32 %v639, %v1104
        %v1106 = vpop.f32.mrb[0].mxu0
        %v1107 = vadd.f32 %v643, %v1106
        %1108 = vmatprep.mubr.bf16.mxu0 %v543
        %1109 = vmatmul.mubr.bf16.gmra.mrb[0].mxu0 %v542
        %v1110 = vpop.f32.mrb[0].mxu0
        %v1111 = vadd.f32 %v639, %v1110
        %v1112 = vpop.f32.mrb[0].mxu0
        %v1113 = vadd.f32 %v643, %v1112
        %v1114 = vpop.f32.mrb[0].mxu0
        %v1115 = vadd.f32 %v639, %v1114
        %v1116 = vpop.f32.mrb[0].mxu0
        %v1117 = vadd.f32 %v643, %v1116
        %1118 = vmatprep.mubr.bf16.mxu0 %v545
        %1119 = vmatmul.mubr.bf16.gmra.mrb[0].mxu0 %v544
        %v1120 = vpop.f32.mrb[0].mxu0
        %v1121 = vadd.f32 %v639, %v1120
        %v1122 = vpop.f32.mrb[0].mxu0
        %v1123 = vadd.f32 %v643, %v1122
        %v1124 = vpop.f32.mrb[0].mxu0
        %v1125 = vadd.f32 %v639, %v1124
        %v1126 = vpop.f32.mrb[0].mxu0
        %v1127 = vadd.f32 %v643, %v1126
        %1128 = vmatprep.mubr.bf16.mxu0 %v547
        %1129 = vmatmul.mubr.bf16.gmra.mrb[0].mxu0 %v546
        %v1130 = vpop.f32.mrb[0].mxu0
        %v1131 = vadd.f32 %v639, %v1130
        %v1132 = vpop.f32.mrb[0].mxu0
        %v1133 = vadd.f32 %v643, %v1132
        %v1134 = vpop.f32.mrb[0].mxu0
        %v1135 = vadd.f32 %v639, %v1134
        %v1136 = vpop.f32.mrb[0].mxu0
        %v1137 = vadd.f32 %v643, %v1136
        %1138 = vmatprep.mubr.bf16.mxu0 %v549
        %1139 = vmatmul.mubr.bf16.gmra.mrb[0].mxu0 %v548
        %v1140 = vpop.f32.mrb[0].mxu0
        %v1141 = vadd.f32 %v639, %v1140
        %v1142 = vpop.f32.mrb[0].mxu0
        %v1143 = vadd.f32 %v643, %v1142
        %v1144 = vpop.f32.mrb[0].mxu0
        %v1145 = vadd.f32 %v639, %v1144
        %v1146 = vpop.f32.mrb[0].mxu0
        %v1147 = vadd.f32 %v643, %v1146
        %1148 = vmatprep.mubr.bf16.mxu0 %v551
        %1149 = vmatmul.mubr.bf16.gmra.mrb[0].mxu0 %v550
        %v1150 = vpop.f32.mrb[0].mxu0
        %v1151 = vadd.f32 %v639, %v1150
        %v1152 = vpop.f32.mrb[0].mxu0
        %v1153 = vadd.f32 %v643, %v1152
        %v1154 = vpop.f32.mrb[0].mxu0
        %v1155 = vadd.f32 %v639, %v1154
        %v1156 = vpop.f32.mrb[0].mxu0
        %v1157 = vadd.f32 %v643, %v1156
        %1158 = vmatprep.mubr.bf16.mxu0 %v553
        %1159 = vmatmul.mubr.bf16.gmra.mrb[0].mxu0 %v552
        %v1160 = vpop.f32.mrb[0].mxu0
        %v1161 = vadd.f32 %v639, %v1160
        %v1162 = vpop.f32.mrb[0].mxu0
        %v1163 = vadd.f32 %v643, %v1162
        %v1164 = vpop.f32.mrb[0].mxu0
        %v1165 = vadd.f32 %v639, %v1164
        %v1166 = vpop.f32.mrb[0].mxu0
        %v1167 = vadd.f32 %v643, %v1166
        %1168 = vdwg.mxu0
        %1169 = vmatprep.subr.bf16.mxu0 %v851
        %1170 = vmatpush1.bf16.msra.mxu0 %v850
        %1171 = vmatprep.subr.bf16.mxu0 %v855
        %1172 = vmatpush1.bf16.msra.mxu0 %v854
        %1173 = vmatprep.subr.bf16.mxu0 %v859
        %1174 = vmatpush1.bf16.msra.mxu0 %v858
        %1175 = vmatprep.subr.bf16.mxu0 %v863
        %1176 = vmatpush1.bf16.msra.mxu0 %v862
        %1177 = vmatprep.subr.bf16.mxu0 %v867
        %1178 = vmatpush1.bf16.msra.mxu0 %v866
        %1179 = vmatprep.subr.bf16.mxu0 %v871
        %1180 = vmatpush1.bf16.msra.mxu0 %v870
        %1181 = vmatprep.subr.bf16.mxu0 %v875
        %1182 = vmatpush1.bf16.msra.mxu0 %v874
        %1183 = vmatprep.subr.bf16.mxu0 %v879
        %1184 = vmatpush1.bf16.msra.mxu0 %v878
        %1185 = vmatprep.subr.bf16.mxu0 %v883
        %1186 = vmatpush1.bf16.msra.mxu0 %v882
        %1187 = vmatprep.subr.bf16.mxu0 %v887
        %1188 = vmatpush1.bf16.msra.mxu0 %v886
        %1189 = vmatprep.subr.bf16.mxu0 %v891
        %1190 = vmatpush1.bf16.msra.mxu0 %v890
        %1191 = vmatprep.subr.bf16.mxu0 %v895
        %1192 = vmatpush1.bf16.msra.mxu0 %v894
        %1193 = vmatprep.subr.bf16.mxu0 %v899
        %1194 = vmatpush1.bf16.msra.mxu0 %v898
        %1195 = vmatprep.subr.bf16.mxu0 %v903
        %1196 = vmatpush1.bf16.msra.mxu0 %v902
        %1197 = vmatprep.subr.bf16.mxu0 %v907
        %1198 = vmatpush1.bf16.msra.mxu0 %v906
        %1199 = vmatprep.subr.bf16.mxu0 %v911
        %1200 = vmatpush1.bf16.msra.mxu0 %v910
        %1201 = vmatprep.mubr.bf16.mxu0 %v475
        %1202 = vmatmul.mubr.bf16.gmra.mrb[0].mxu0 %v474
        %v1203 = vpop.f32.mrb[0].mxu0
        %v1204 = vadd.f32 %v647, %v1203
        %v1205 = vpop.f32.mrb[0].mxu0
        %v1206 = vadd.f32 %v651, %v1205
        %v1207 = vpop.f32.mrb[0].mxu0
        %v1208 = vadd.f32 %v647, %v1207
        %v1209 = vpop.f32.mrb[0].mxu0
        %v1210 = vadd.f32 %v651, %v1209
        %1211 = vmatprep.mubr.bf16.mxu0 %v477
        %1212 = vmatmul.mubr.bf16.gmra.mrb[0].mxu0 %v476
        %v1213 = vpop.f32.mrb[0].mxu0
        %v1214 = vadd.f32 %v647, %v1213
        %v1215 = vpop.f32.mrb[0].mxu0
        %v1216 = vadd.f32 %v651, %v1215
        %v1217 = vpop.f32.mrb[0].mxu0
        %v1218 = vadd.f32 %v647, %v1217
        %v1219 = vpop.f32.mrb[0].mxu0
        %v1220 = vadd.f32 %v651, %v1219
        %1221 = vmatprep.mubr.bf16.mxu0 %v479
        %1222 = vmatmul.mubr.bf16.gmra.mrb[0].mxu0 %v478
        %v1223 = vpop.f32.mrb[0].mxu0
        %v1224 = vadd.f32 %v647, %v1223
        %v1225 = vpop.f32.mrb[0].mxu0
        %v1226 = vadd.f32 %v651, %v1225
        %v1227 = vpop.f32.mrb[0].mxu0
        %v1228 = vadd.f32 %v647, %v1227
        %v1229 = vpop.f32.mrb[0].mxu0
        %v1230 = vadd.f32 %v651, %v1229
        %1231 = vmatprep.mubr.bf16.mxu0 %v481
        %1232 = vmatmul.mubr.bf16.gmra.mrb[0].mxu0 %v480
        %v1233 = vpop.f32.mrb[0].mxu0
        %v1234 = vadd.f32 %v647, %v1233
        %v1235 = vpop.f32.mrb[0].mxu0
        %v1236 = vadd.f32 %v651, %v1235
        %v1237 = vpop.f32.mrb[0].mxu0
        %v1238 = vadd.f32 %v647, %v1237
        %v1239 = vpop.f32.mrb[0].mxu0
        %v1240 = vadd.f32 %v651, %v1239
        %1241 = vmatprep.mubr.bf16.mxu0 %v483
        %1242 = vmatmul.mubr.bf16.gmra.mrb[0].mxu0 %v482
        %v1243 = vpop.f32.mrb[0].mxu0
        %v1244 = vadd.f32 %v647, %v1243
        %v1245 = vpop.f32.mrb[0].mxu0
        %v1246 = vadd.f32 %v651, %v1245
        %v1247 = vpop.f32.mrb[0].mxu0
        %v1248 = vadd.f32 %v647, %v1247
        %v1249 = vpop.f32.mrb[0].mxu0
        %v1250 = vadd.f32 %v651, %v1249
        %1251 = vmatprep.mubr.bf16.mxu0 %v485
        %1252 = vmatmul.mubr.bf16.gmra.mrb[0].mxu0 %v484
        %v1253 = vpop.f32.mrb[0].mxu0
        %v1254 = vadd.f32 %v647, %v1253
        %v1255 = vpop.f32.mrb[0].mxu0
        %v1256 = vadd.f32 %v651, %v1255
        %v1257 = vpop.f32.mrb[0].mxu0
        %v1258 = vadd.f32 %v647, %v1257
        %v1259 = vpop.f32.mrb[0].mxu0
        %v1260 = vadd.f32 %v651, %v1259
        %1261 = vmatprep.mubr.bf16.mxu0 %v487
        %1262 = vmatmul.mubr.bf16.gmra.mrb[0].mxu0 %v486
        %v1263 = vpop.f32.mrb[0].mxu0
        %v1264 = vadd.f32 %v647, %v1263
        %v1265 = vpop.f32.mrb[0].mxu0
        %v1266 = vadd.f32 %v651, %v1265
        %v1267 = vpop.f32.mrb[0].mxu0
        %v1268 = vadd.f32 %v647, %v1267
        %v1269 = vpop.f32.mrb[0].mxu0
        %v1270 = vadd.f32 %v651, %v1269
        %1271 = vmatprep.mubr.bf16.mxu0 %v489
        %1272 = vmatmul.mubr.bf16.gmra.mrb[0].mxu0 %v488
        %v1273 = vpop.f32.mrb[0].mxu0
        %v1274 = vadd.f32 %v647, %v1273
        %v1275 = vpop.f32.mrb[0].mxu0
        %v1276 = vadd.f32 %v651, %v1275
        %v1277 = vpop.f32.mrb[0].mxu0
        %v1278 = vadd.f32 %v647, %v1277
        %v1279 = vpop.f32.mrb[0].mxu0
        %v1280 = vadd.f32 %v651, %v1279
        %1281 = vmatprep.mubr.bf16.mxu0 %v539
        %1282 = vmatmul.mubr.bf16.gmra.mrb[0].mxu0 %v538
        %v1283 = vpop.f32.mrb[0].mxu0
        %v1284 = vadd.f32 %v647, %v1283
        %v1285 = vpop.f32.mrb[0].mxu0
        %v1286 = vadd.f32 %v651, %v1285
        %v1287 = vpop.f32.mrb[0].mxu0
        %v1288 = vadd.f32 %v647, %v1287
        %v1289 = vpop.f32.mrb[0].mxu0
        %v1290 = vadd.f32 %v651, %v1289
        %1291 = vmatprep.mubr.bf16.mxu0 %v541
        %1292 = vmatmul.mubr.bf16.gmra.mrb[0].mxu0 %v540
        %v1293 = vpop.f32.mrb[0].mxu0
        %v1294 = vadd.f32 %v647, %v1293
        %v1295 = vpop.f32.mrb[0].mxu0
        %v1296 = vadd.f32 %v651, %v1295
        %v1297 = vpop.f32.mrb[0].mxu0
        %v1298 = vadd.f32 %v647, %v1297
        %v1299 = vpop.f32.mrb[0].mxu0
        %v1300 = vadd.f32 %v651, %v1299
        %1301 = vmatprep.mubr.bf16.mxu0 %v543
        %1302 = vmatmul.mubr.bf16.gmra.mrb[0].mxu0 %v542
        %v1303 = vpop.f32.mrb[0].mxu0
        %v1304 = vadd.f32 %v647, %v1303
        %v1305 = vpop.f32.mrb[0].mxu0
        %v1306 = vadd.f32 %v651, %v1305
        %v1307 = vpop.f32.mrb[0].mxu0
        %v1308 = vadd.f32 %v647, %v1307
        %v1309 = vpop.f32.mrb[0].mxu0
        %v1310 = vadd.f32 %v651, %v1309
        %1311 = vmatprep.mubr.bf16.mxu0 %v545
        %1312 = vmatmul.mubr.bf16.gmra.mrb[0].mxu0 %v544
        %v1313 = vpop.f32.mrb[0].mxu0
        %v1314 = vadd.f32 %v647, %v1313
        %v1315 = vpop.f32.mrb[0].mxu0
        %v1316 = vadd.f32 %v651, %v1315
        %v1317 = vpop.f32.mrb[0].mxu0
        %v1318 = vadd.f32 %v647, %v1317
        %v1319 = vpop.f32.mrb[0].mxu0
        %v1320 = vadd.f32 %v651, %v1319
        %1321 = vmatprep.mubr.bf16.mxu0 %v547
        %1322 = vmatmul.mubr.bf16.gmra.mrb[0].mxu0 %v546
        %v1323 = vpop.f32.mrb[0].mxu0
        %v1324 = vadd.f32 %v647, %v1323
        %v1325 = vpop.f32.mrb[0].mxu0
        %v1326 = vadd.f32 %v651, %v1325
        %v1327 = vpop.f32.mrb[0].mxu0
        %v1328 = vadd.f32 %v647, %v1327
        %v1329 = vpop.f32.mrb[0].mxu0
        %v1330 = vadd.f32 %v651, %v1329
        %1331 = vmatprep.mubr.bf16.mxu0 %v549
        %1332 = vmatmul.mubr.bf16.gmra.mrb[0].mxu0 %v548
        %v1333 = vpop.f32.mrb[0].mxu0
        %v1334 = vadd.f32 %v647, %v1333
        %v1335 = vpop.f32.mrb[0].mxu0
        %v1336 = vadd.f32 %v651, %v1335
        %v1337 = vpop.f32.mrb[0].mxu0
        %v1338 = vadd.f32 %v647, %v1337
        %v1339 = vpop.f32.mrb[0].mxu0
        %v1340 = vadd.f32 %v651, %v1339
        %1341 = vmatprep.mubr.bf16.mxu0 %v551
        %1342 = vmatmul.mubr.bf16.gmra.mrb[0].mxu0 %v550
        %v1343 = vpop.f32.mrb[0].mxu0
        %v1344 = vadd.f32 %v647, %v1343
        %v1345 = vpop.f32.mrb[0].mxu0
        %v1346 = vadd.f32 %v651, %v1345
        %v1347 = vpop.f32.mrb[0].mxu0
        %v1348 = vadd.f32 %v647, %v1347
        %v1349 = vpop.f32.mrb[0].mxu0
        %v1350 = vadd.f32 %v651, %v1349
        %1351 = vmatprep.mubr.bf16.mxu0 %v553
        %1352 = vmatmul.mubr.bf16.gmra.mrb[0].mxu0 %v552
        %v1353 = vpop.f32.mrb[0].mxu0
        %v1354 = vadd.f32 %v647, %v1353
        %v1355 = vpop.f32.mrb[0].mxu0
        %v1356 = vadd.f32 %v651, %v1355
        %v1357 = vpop.f32.mrb[0].mxu0
        %v1358 = vadd.f32 %v647, %v1357
        %v1359 = vpop.f32.mrb[0].mxu0
        %v1360 = vadd.f32 %v651, %v1359
        %1361 = vdwg.mxu0
        %v1362 = vmul.f32 %v1011, %v1011
        %v1363 = vmul.f32 %v1013, %v1013
        %v1364 = vmul.f32 %v1204, %v1204
        %v1365 = vmul.f32 %v1206, %v1206
        %v1366 = vmul.f32 %v1015, %v1015
        %v1367 = vmul.f32 %v1017, %v1017
        %v1368 = vmul.f32 %v1208, %v1208
        %v1369 = vmul.f32 %v1210, %v1210
        %v1370 = vmul.f32 %v1021, %v1021
        %v1371 = vmul.f32 %v1023, %v1023
        %v1372 = vmul.f32 %v1214, %v1214
        %v1373 = vmul.f32 %v1216, %v1216
        %v1374 = vmul.f32 %v1025, %v1025
        %v1375 = vmul.f32 %v1027, %v1027
        %v1376 = vmul.f32 %v1218, %v1218
        %v1377 = vmul.f32 %v1220, %v1220
        %v1378 = vmul.f32 %v1031, %v1031
        %v1379 = vmul.f32 %v1033, %v1033
        %v1380 = vmul.f32 %v1224, %v1224
        %v1381 = vmul.f32 %v1226, %v1226
        %v1382 = vmul.f32 %v1035, %v1035
        %v1383 = vmul.f32 %v1037, %v1037
        %v1384 = vmul.f32 %v1228, %v1228
        %v1385 = vmul.f32 %v1230, %v1230
        %v1386 = vmul.f32 %v1041, %v1041
        %v1387 = vmul.f32 %v1043, %v1043
        %v1388 = vmul.f32 %v1234, %v1234
        %v1389 = vmul.f32 %v1236, %v1236
        %v1390 = vmul.f32 %v1045, %v1045
        %v1391 = vmul.f32 %v1047, %v1047
        %v1392 = vmul.f32 %v1238, %v1238
        %v1393 = vmul.f32 %v1240, %v1240
        %v1394 = vmul.f32 %v1051, %v1051
        %v1395 = vmul.f32 %v1053, %v1053
        %v1396 = vmul.f32 %v1244, %v1244
        %v1397 = vmul.f32 %v1246, %v1246
        %v1398 = vmul.f32 %v1055, %v1055
        %v1399 = vmul.f32 %v1057, %v1057
        %v1400 = vmul.f32 %v1248, %v1248
        %v1401 = vmul.f32 %v1250, %v1250
        %v1402 = vmul.f32 %v1061, %v1061
        %v1403 = vmul.f32 %v1063, %v1063
        %v1404 = vmul.f32 %v1254, %v1254
        %v1405 = vmul.f32 %v1256, %v1256
        %v1406 = vmul.f32 %v1065, %v1065
        %v1407 = vmul.f32 %v1067, %v1067
        %v1408 = vmul.f32 %v1258, %v1258
        %v1409 = vmul.f32 %v1260, %v1260
        %v1410 = vmul.f32 %v1071, %v1071
        %v1411 = vmul.f32 %v1073, %v1073
        %v1412 = vmul.f32 %v1264, %v1264
        %v1413 = vmul.f32 %v1266, %v1266
        %v1414 = vmul.f32 %v1075, %v1075
        %v1415 = vmul.f32 %v1077, %v1077
        %v1416 = vmul.f32 %v1268, %v1268
        %v1417 = vmul.f32 %v1270, %v1270
        %v1418 = vmul.f32 %v1081, %v1081
        %v1419 = vmul.f32 %v1083, %v1083
        %v1420 = vmul.f32 %v1274, %v1274
        %v1421 = vmul.f32 %v1276, %v1276
        %v1422 = vmul.f32 %v1085, %v1085
        %v1423 = vmul.f32 %v1087, %v1087
        %v1424 = vmul.f32 %v1278, %v1278
        %v1425 = vmul.f32 %v1280, %v1280
        %v1426 = vmul.f32 %v1091, %v1091
        %v1427 = vmul.f32 %v1093, %v1093
        %v1428 = vmul.f32 %v1284, %v1284
        %v1429 = vmul.f32 %v1286, %v1286
        %v1430 = vmul.f32 %v1095, %v1095
        %v1431 = vmul.f32 %v1097, %v1097
        %v1432 = vmul.f32 %v1288, %v1288
        %v1433 = vmul.f32 %v1290, %v1290
        %v1434 = vmul.f32 %v1101, %v1101
        %v1435 = vmul.f32 %v1103, %v1103
        %v1436 = vmul.f32 %v1294, %v1294
        %v1437 = vmul.f32 %v1296, %v1296
        %v1438 = vmul.f32 %v1105, %v1105
        %v1439 = vmul.f32 %v1107, %v1107
        %v1440 = vmul.f32 %v1298, %v1298
        %v1441 = vmul.f32 %v1300, %v1300
        %v1442 = vmul.f32 %v1111, %v1111
        %v1443 = vmul.f32 %v1113, %v1113
        %v1444 = vmul.f32 %v1304, %v1304
        %v1445 = vmul.f32 %v1306, %v1306
        %v1446 = vmul.f32 %v1115, %v1115
        %v1447 = vmul.f32 %v1117, %v1117
        %v1448 = vmul.f32 %v1308, %v1308
        %v1449 = vmul.f32 %v1310, %v1310
        %v1450 = vmul.f32 %v1121, %v1121
        %v1451 = vmul.f32 %v1123, %v1123
        %v1452 = vmul.f32 %v1314, %v1314
        %v1453 = vmul.f32 %v1316, %v1316
        %v1454 = vmul.f32 %v1125, %v1125
        %v1455 = vmul.f32 %v1127, %v1127
        %v1456 = vmul.f32 %v1318, %v1318
        %v1457 = vmul.f32 %v1320, %v1320
        %v1458 = vmul.f32 %v1131, %v1131
        %v1459 = vmul.f32 %v1133, %v1133
        %v1460 = vmul.f32 %v1324, %v1324
        %v1461 = vmul.f32 %v1326, %v1326
        %v1462 = vmul.f32 %v1135, %v1135
        %v1463 = vmul.f32 %v1137, %v1137
        %v1464 = vmul.f32 %v1328, %v1328
        %v1465 = vmul.f32 %v1330, %v1330
        %v1466 = vmul.f32 %v1141, %v1141
        %v1467 = vmul.f32 %v1143, %v1143
        %v1468 = vmul.f32 %v1334, %v1334
        %v1469 = vmul.f32 %v1336, %v1336
        %v1470 = vmul.f32 %v1145, %v1145
        %v1471 = vmul.f32 %v1147, %v1147
        %v1472 = vmul.f32 %v1338, %v1338
        %v1473 = vmul.f32 %v1340, %v1340
        %v1474 = vmul.f32 %v1151, %v1151
        %v1475 = vmul.f32 %v1153, %v1153
        %v1476 = vmul.f32 %v1344, %v1344
        %v1477 = vmul.f32 %v1346, %v1346
        %v1478 = vmul.f32 %v1155, %v1155
        %v1479 = vmul.f32 %v1157, %v1157
        %v1480 = vmul.f32 %v1348, %v1348
        %v1481 = vmul.f32 %v1350, %v1350
        %v1482 = vmul.f32 %v1161, %v1161
        %v1483 = vmul.f32 %v1163, %v1163
        %v1484 = vmul.f32 %v1354, %v1354
        %v1485 = vmul.f32 %v1356, %v1356
        %v1486 = vmul.f32 %v1165, %v1165
        %v1487 = vmul.f32 %v1167, %v1167
        %v1488 = vmul.f32 %v1358, %v1358
        %v1489 = vmul.f32 %v1360, %v1360
        %v1490 = vmul.f32 %v1011, %v1362
        %v1491 = vmul.f32 %v1013, %v1363
        %v1492 = vmul.f32 %v1204, %v1364
        %v1493 = vmul.f32 %v1206, %v1365
        %v1494 = vmul.f32 %v1015, %v1366
        %v1495 = vmul.f32 %v1017, %v1367
        %v1496 = vmul.f32 %v1208, %v1368
        %v1497 = vmul.f32 %v1210, %v1369
        %v1498 = vmul.f32 %v1021, %v1370
        %v1499 = vmul.f32 %v1023, %v1371
        %v1500 = vmul.f32 %v1214, %v1372
        %v1501 = vmul.f32 %v1216, %v1373
        %v1502 = vmul.f32 %v1025, %v1374
        %v1503 = vmul.f32 %v1027, %v1375
        %v1504 = vmul.f32 %v1218, %v1376
        %v1505 = vmul.f32 %v1220, %v1377
        %v1506 = vmul.f32 %v1031, %v1378
        %v1507 = vmul.f32 %v1033, %v1379
        %v1508 = vmul.f32 %v1224, %v1380
        %v1509 = vmul.f32 %v1226, %v1381
        %v1510 = vmul.f32 %v1035, %v1382
        %v1511 = vmul.f32 %v1037, %v1383
        %v1512 = vmul.f32 %v1228, %v1384
        %v1513 = vmul.f32 %v1230, %v1385
        %v1514 = vmul.f32 %v1041, %v1386
        %v1515 = vmul.f32 %v1043, %v1387
        %v1516 = vmul.f32 %v1234, %v1388
        %v1517 = vmul.f32 %v1236, %v1389
        %v1518 = vmul.f32 %v1045, %v1390
        %v1519 = vmul.f32 %v1047, %v1391
        %v1520 = vmul.f32 %v1238, %v1392
        %v1521 = vmul.f32 %v1240, %v1393
        %v1522 = vmul.f32 %v1051, %v1394
        %v1523 = vmul.f32 %v1053, %v1395
        %v1524 = vmul.f32 %v1244, %v1396
        %v1525 = vmul.f32 %v1246, %v1397
        %v1526 = vmul.f32 %v1055, %v1398
        %v1527 = vmul.f32 %v1057, %v1399
        %v1528 = vmul.f32 %v1248, %v1400
        %v1529 = vmul.f32 %v1250, %v1401
        %v1530 = vmul.f32 %v1061, %v1402
        %v1531 = vmul.f32 %v1063, %v1403
        %v1532 = vmul.f32 %v1254, %v1404
        %v1533 = vmul.f32 %v1256, %v1405
        %v1534 = vmul.f32 %v1065, %v1406
        %v1535 = vmul.f32 %v1067, %v1407
        %v1536 = vmul.f32 %v1258, %v1408
        %v1537 = vmul.f32 %v1260, %v1409
        %v1538 = vmul.f32 %v1071, %v1410
        %v1539 = vmul.f32 %v1073, %v1411
        %v1540 = vmul.f32 %v1264, %v1412
        %v1541 = vmul.f32 %v1266, %v1413
        %v1542 = vmul.f32 %v1075, %v1414
        %v1543 = vmul.f32 %v1077, %v1415
        %v1544 = vmul.f32 %v1268, %v1416
        %v1545 = vmul.f32 %v1270, %v1417
        %v1546 = vmul.f32 %v1081, %v1418
        %v1547 = vmul.f32 %v1083, %v1419
        %v1548 = vmul.f32 %v1274, %v1420
        %v1549 = vmul.f32 %v1276, %v1421
        %v1550 = vmul.f32 %v1085, %v1422
        %v1551 = vmul.f32 %v1087, %v1423
        %v1552 = vmul.f32 %v1278, %v1424
        %v1553 = vmul.f32 %v1280, %v1425
        %v1554 = vmul.f32 %v1091, %v1426
        %v1555 = vmul.f32 %v1093, %v1427
        %v1556 = vmul.f32 %v1284, %v1428
        %v1557 = vmul.f32 %v1286, %v1429
        %v1558 = vmul.f32 %v1095, %v1430
        %v1559 = vmul.f32 %v1097, %v1431
        %v1560 = vmul.f32 %v1288, %v1432
        %v1561 = vmul.f32 %v1290, %v1433
        %v1562 = vmul.f32 %v1101, %v1434
        %v1563 = vmul.f32 %v1103, %v1435
        %v1564 = vmul.f32 %v1294, %v1436
        %v1565 = vmul.f32 %v1296, %v1437
        %v1566 = vmul.f32 %v1105, %v1438
        %v1567 = vmul.f32 %v1107, %v1439
        %v1568 = vmul.f32 %v1298, %v1440
        %v1569 = vmul.f32 %v1300, %v1441
        %v1570 = vmul.f32 %v1111, %v1442
        %v1571 = vmul.f32 %v1113, %v1443
        %v1572 = vmul.f32 %v1304, %v1444
        %v1573 = vmul.f32 %v1306, %v1445
        %v1574 = vmul.f32 %v1115, %v1446
        %v1575 = vmul.f32 %v1117, %v1447
        %v1576 = vmul.f32 %v1308, %v1448
        %v1577 = vmul.f32 %v1310, %v1449
        %v1578 = vmul.f32 %v1121, %v1450
        %v1579 = vmul.f32 %v1123, %v1451
        %v1580 = vmul.f32 %v1314, %v1452
        %v1581 = vmul.f32 %v1316, %v1453
        %v1582 = vmul.f32 %v1125, %v1454
        %v1583 = vmul.f32 %v1127, %v1455
        %v1584 = vmul.f32 %v1318, %v1456
        %v1585 = vmul.f32 %v1320, %v1457
        %v1586 = vmul.f32 %v1131, %v1458
        %v1587 = vmul.f32 %v1133, %v1459
        %v1588 = vmul.f32 %v1324, %v1460
        %v1589 = vmul.f32 %v1326, %v1461
        %v1590 = vmul.f32 %v1135, %v1462
        %v1591 = vmul.f32 %v1137, %v1463
        %v1592 = vmul.f32 %v1328, %v1464
        %v1593 = vmul.f32 %v1330, %v1465
        %v1594 = vmul.f32 %v1141, %v1466
        %v1595 = vmul.f32 %v1143, %v1467
        %v1596 = vmul.f32 %v1334, %v1468
        %v1597 = vmul.f32 %v1336, %v1469
        %v1598 = vmul.f32 %v1145, %v1470
        %v1599 = vmul.f32 %v1147, %v1471
        %v1600 = vmul.f32 %v1338, %v1472
        %v1601 = vmul.f32 %v1340, %v1473
        %v1602 = vmul.f32 %v1151, %v1474
        %v1603 = vmul.f32 %v1153, %v1475
        %v1604 = vmul.f32 %v1344, %v1476
        %v1605 = vmul.f32 %v1346, %v1477
        %v1606 = vmul.f32 %v1155, %v1478
        %v1607 = vmul.f32 %v1157, %v1479
        %v1608 = vmul.f32 %v1348, %v1480
        %v1609 = vmul.f32 %v1350, %v1481
        %v1610 = vmul.f32 %v1161, %v1482
        %v1611 = vmul.f32 %v1163, %v1483
        %v1612 = vmul.f32 %v1354, %v1484
        %v1613 = vmul.f32 %v1356, %v1485
        %v1614 = vmul.f32 %v1165, %v1486
        %v1615 = vmul.f32 %v1167, %v1487
        %v1616 = vmul.f32 %v1358, %v1488
        %v1617 = vmul.f32 %v1360, %v1489
        %v1618 = vmul.f32 %v1490, 0.044715
        %v1619 = vmul.f32 %v1491, 0.044715
        %v1620 = vmul.f32 %v1492, 0.044715
        %v1621 = vmul.f32 %v1493, 0.044715
        %v1622 = vmul.f32 %v1494, 0.044715
        %v1623 = vmul.f32 %v1495, 0.044715
        %v1624 = vmul.f32 %v1496, 0.044715
        %v1625 = vmul.f32 %v1497, 0.044715
        %v1626 = vmul.f32 %v1498, 0.044715
        %v1627 = vmul.f32 %v1499, 0.044715
        %v1628 = vmul.f32 %v1500, 0.044715
        %v1629 = vmul.f32 %v1501, 0.044715
        %v1630 = vmul.f32 %v1502, 0.044715
        %v1631 = vmul.f32 %v1503, 0.044715
        %v1632 = vmul.f32 %v1504, 0.044715
        %v1633 = vmul.f32 %v1505, 0.044715
        %v1634 = vmul.f32 %v1506, 0.044715
        %v1635 = vmul.f32 %v1507, 0.044715
        %v1636 = vmul.f32 %v1508, 0.044715
        %v1637 = vmul.f32 %v1509, 0.044715
        %v1638 = vmul.f32 %v1510, 0.044715
        %v1639 = vmul.f32 %v1511, 0.044715
        %v1640 = vmul.f32 %v1512, 0.044715
        %v1641 = vmul.f32 %v1513, 0.044715
        %v1642 = vmul.f32 %v1514, 0.044715
        %v1643 = vmul.f32 %v1515, 0.044715
        %v1644 = vmul.f32 %v1516, 0.044715
        %v1645 = vmul.f32 %v1517, 0.044715
        %v1646 = vmul.f32 %v1518, 0.044715
        %v1647 = vmul.f32 %v1519, 0.044715
        %v1648 = vmul.f32 %v1520, 0.044715
        %v1649 = vmul.f32 %v1521, 0.044715
        %v1650 = vmul.f32 %v1522, 0.044715
        %v1651 = vmul.f32 %v1523, 0.044715
        %v1652 = vmul.f32 %v1524, 0.044715
        %v1653 = vmul.f32 %v1525, 0.044715
        %v1654 = vmul.f32 %v1526, 0.044715
        %v1655 = vmul.f32 %v1527, 0.044715
        %v1656 = vmul.f32 %v1528, 0.044715
        %v1657 = vmul.f32 %v1529, 0.044715
        %v1658 = vmul.f32 %v1530, 0.044715
        %v1659 = vmul.f32 %v1531, 0.044715
        %v1660 = vmul.f32 %v1532, 0.044715
        %v1661 = vmul.f32 %v1533, 0.044715
        %v1662 = vmul.f32 %v1534, 0.044715
        %v1663 = vmul.f32 %v1535, 0.044715
        %v1664 = vmul.f32 %v1536, 0.044715
        %v1665 = vmul.f32 %v1537, 0.044715
        %v1666 = vmul.f32 %v1538, 0.044715
        %v1667 = vmul.f32 %v1539, 0.044715
        %v1668 = vmul.f32 %v1540, 0.044715
        %v1669 = vmul.f32 %v1541, 0.044715
        %v1670 = vmul.f32 %v1542, 0.044715
        %v1671 = vmul.f32 %v1543, 0.044715
        %v1672 = vmul.f32 %v1544, 0.044715
        %v1673 = vmul.f32 %v1545, 0.044715
        %v1674 = vmul.f32 %v1546, 0.044715
        %v1675 = vmul.f32 %v1547, 0.044715
        %v1676 = vmul.f32 %v1548, 0.044715
        %v1677 = vmul.f32 %v1549, 0.044715
        %v1678 = vmul.f32 %v1550, 0.044715
        %v1679 = vmul.f32 %v1551, 0.044715
        %v1680 = vmul.f32 %v1552, 0.044715
        %v1681 = vmul.f32 %v1553, 0.044715
        %v1682 = vmul.f32 %v1554, 0.044715
        %v1683 = vmul.f32 %v1555, 0.044715
        %v1684 = vmul.f32 %v1556, 0.044715
        %v1685 = vmul.f32 %v1557, 0.044715
        %v1686 = vmul.f32 %v1558, 0.044715
        %v1687 = vmul.f32 %v1559, 0.044715
        %v1688 = vmul.f32 %v1560, 0.044715
        %v1689 = vmul.f32 %v1561, 0.044715
        %v1690 = vmul.f32 %v1562, 0.044715
        %v1691 = vmul.f32 %v1563, 0.044715
        %v1692 = vmul.f32 %v1564, 0.044715
        %v1693 = vmul.f32 %v1565, 0.044715
        %v1694 = vmul.f32 %v1566, 0.044715
        %v1695 = vmul.f32 %v1567, 0.044715
        %v1696 = vmul.f32 %v1568, 0.044715
        %v1697 = vmul.f32 %v1569, 0.044715
        %v1698 = vmul.f32 %v1570, 0.044715
        %v1699 = vmul.f32 %v1571, 0.044715
        %v1700 = vmul.f32 %v1572, 0.044715
        %v1701 = vmul.f32 %v1573, 0.044715
        %v1702 = vmul.f32 %v1574, 0.044715
        %v1703 = vmul.f32 %v1575, 0.044715
        %v1704 = vmul.f32 %v1576, 0.044715
        %v1705 = vmul.f32 %v1577, 0.044715
        %v1706 = vmul.f32 %v1578, 0.044715
        %v1707 = vmul.f32 %v1579, 0.044715
        %v1708 = vmul.f32 %v1580, 0.044715
        %v1709 = vmul.f32 %v1581, 0.044715
        %v1710 = vmul.f32 %v1582, 0.044715
        %v1711 = vmul.f32 %v1583, 0.044715
        %v1712 = vmul.f32 %v1584, 0.044715
        %v1713 = vmul.f32 %v1585, 0.044715
        %v1714 = vmul.f32 %v1586, 0.044715
        %v1715 = vmul.f32 %v1587, 0.044715
        %v1716 = vmul.f32 %v1588, 0.044715
        %v1717 = vmul.f32 %v1589, 0.044715
        %v1718 = vmul.f32 %v1590, 0.044715
        %v1719 = vmul.f32 %v1591, 0.044715
        %v1720 = vmul.f32 %v1592, 0.044715
        %v1721 = vmul.f32 %v1593, 0.044715
        %v1722 = vmul.f32 %v1594, 0.044715
        %v1723 = vmul.f32 %v1595, 0.044715
        %v1724 = vmul.f32 %v1596, 0.044715
        %v1725 = vmul.f32 %v1597, 0.044715
        %v1726 = vmul.f32 %v1598, 0.044715
        %v1727 = vmul.f32 %v1599, 0.044715
        %v1728 = vmul.f32 %v1600, 0.044715
        %v1729 = vmul.f32 %v1601, 0.044715
        %v1730 = vmul.f32 %v1602, 0.044715
        %v1731 = vmul.f32 %v1603, 0.044715
        %v1732 = vmul.f32 %v1604, 0.044715
        %v1733 = vmul.f32 %v1605, 0.044715
        %v1734 = vmul.f32 %v1606, 0.044715
        %v1735 = vmul.f32 %v1607, 0.044715
        %v1736 = vmul.f32 %v1608, 0.044715
        %v1737 = vmul.f32 %v1609, 0.044715
        %v1738 = vmul.f32 %v1610, 0.044715
        %v1739 = vmul.f32 %v1611, 0.044715
        %v1740 = vmul.f32 %v1612, 0.044715
        %v1741 = vmul.f32 %v1613, 0.044715
        %v1742 = vmul.f32 %v1614, 0.044715
        %v1743 = vmul.f32 %v1615, 0.044715
        %v1744 = vmul.f32 %v1616, 0.044715
        %v1745 = vmul.f32 %v1617, 0.044715
        %v1746 = vadd.f32 %v1011, %v1618
        %v1747 = vadd.f32 %v1013, %v1619
        %v1748 = vadd.f32 %v1204, %v1620
        %v1749 = vadd.f32 %v1206, %v1621
        %v1750 = vadd.f32 %v1015, %v1622
        %v1751 = vadd.f32 %v1017, %v1623
        %v1752 = vadd.f32 %v1208, %v1624
        %v1753 = vadd.f32 %v1210, %v1625
        %v1754 = vadd.f32 %v1021, %v1626
        %v1755 = vadd.f32 %v1023, %v1627
        %v1756 = vadd.f32 %v1214, %v1628
        %v1757 = vadd.f32 %v1216, %v1629
        %v1758 = vadd.f32 %v1025, %v1630
        %v1759 = vadd.f32 %v1027, %v1631
        %v1760 = vadd.f32 %v1218, %v1632
        %v1761 = vadd.f32 %v1220, %v1633
        %v1762 = vadd.f32 %v1031, %v1634
        %v1763 = vadd.f32 %v1033, %v1635
        %v1764 = vadd.f32 %v1224, %v1636
        %v1765 = vadd.f32 %v1226, %v1637
        %v1766 = vadd.f32 %v1035, %v1638
        %v1767 = vadd.f32 %v1037, %v1639
        %v1768 = vadd.f32 %v1228, %v1640
        %v1769 = vadd.f32 %v1230, %v1641
        %v1770 = vadd.f32 %v1041, %v1642
        %v1771 = vadd.f32 %v1043, %v1643
        %v1772 = vadd.f32 %v1234, %v1644
        %v1773 = vadd.f32 %v1236, %v1645
        %v1774 = vadd.f32 %v1045, %v1646
        %v1775 = vadd.f32 %v1047, %v1647
        %v1776 = vadd.f32 %v1238, %v1648
        %v1777 = vadd.f32 %v1240, %v1649
        %v1778 = vadd.f32 %v1051, %v1650
        %v1779 = vadd.f32 %v1053, %v1651
        %v1780 = vadd.f32 %v1244, %v1652
        %v1781 = vadd.f32 %v1246, %v1653
        %v1782 = vadd.f32 %v1055, %v1654
        %v1783 = vadd.f32 %v1057, %v1655
        %v1784 = vadd.f32 %v1248, %v1656
        %v1785 = vadd.f32 %v1250, %v1657
        %v1786 = vadd.f32 %v1061, %v1658
        %v1787 = vadd.f32 %v1063, %v1659
        %v1788 = vadd.f32 %v1254, %v1660
        %v1789 = vadd.f32 %v1256, %v1661
        %v1790 = vadd.f32 %v1065, %v1662
        %v1791 = vadd.f32 %v1067, %v1663
        %v1792 = vadd.f32 %v1258, %v1664
        %v1793 = vadd.f32 %v1260, %v1665
        %v1794 = vadd.f32 %v1071, %v1666
        %v1795 = vadd.f32 %v1073, %v1667
        %v1796 = vadd.f32 %v1264, %v1668
        %v1797 = vadd.f32 %v1266, %v1669
        %v1798 = vadd.f32 %v1075, %v1670
        %v1799 = vadd.f32 %v1077, %v1671
        %v1800 = vadd.f32 %v1268, %v1672
        %v1801 = vadd.f32 %v1270, %v1673
        %v1802 = vadd.f32 %v1081, %v1674
        %v1803 = vadd.f32 %v1083, %v1675
        %v1804 = vadd.f32 %v1274, %v1676
        %v1805 = vadd.f32 %v1276, %v1677
        %v1806 = vadd.f32 %v1085, %v1678
        %v1807 = vadd.f32 %v1087, %v1679
        %v1808 = vadd.f32 %v1278, %v1680
        %v1809 = vadd.f32 %v1280, %v1681
        %v1810 = vadd.f32 %v1091, %v1682
        %v1811 = vadd.f32 %v1093, %v1683
        %v1812 = vadd.f32 %v1284, %v1684
        %v1813 = vadd.f32 %v1286, %v1685
        %v1814 = vadd.f32 %v1095, %v1686
        %v1815 = vadd.f32 %v1097, %v1687
        %v1816 = vadd.f32 %v1288, %v1688
        %v1817 = vadd.f32 %v1290, %v1689
        %v1818 = vadd.f32 %v1101, %v1690
        %v1819 = vadd.f32 %v1103, %v1691
        %v1820 = vadd.f32 %v1294, %v1692
        %v1821 = vadd.f32 %v1296, %v1693
        %v1822 = vadd.f32 %v1105, %v1694
        %v1823 = vadd.f32 %v1107, %v1695
        %v1824 = vadd.f32 %v1298, %v1696
        %v1825 = vadd.f32 %v1300, %v1697
        %v1826 = vadd.f32 %v1111, %v1698
        %v1827 = vadd.f32 %v1113, %v1699
        %v1828 = vadd.f32 %v1304, %v1700
        %v1829 = vadd.f32 %v1306, %v1701
        %v1830 = vadd.f32 %v1115, %v1702
        %v1831 = vadd.f32 %v1117, %v1703
        %v1832 = vadd.f32 %v1308, %v1704
        %v1833 = vadd.f32 %v1310, %v1705
        %v1834 = vadd.f32 %v1121, %v1706
        %v1835 = vadd.f32 %v1123, %v1707
        %v1836 = vadd.f32 %v1314, %v1708
        %v1837 = vadd.f32 %v1316, %v1709
        %v1838 = vadd.f32 %v1125, %v1710
        %v1839 = vadd.f32 %v1127, %v1711
        %v1840 = vadd.f32 %v1318, %v1712
        %v1841 = vadd.f32 %v1320, %v1713
        %v1842 = vadd.f32 %v1131, %v1714
        %v1843 = vadd.f32 %v1133, %v1715
        %v1844 = vadd.f32 %v1324, %v1716
        %v1845 = vadd.f32 %v1326, %v1717
        %v1846 = vadd.f32 %v1135, %v1718
        %v1847 = vadd.f32 %v1137, %v1719
        %v1848 = vadd.f32 %v1328, %v1720
        %v1849 = vadd.f32 %v1330, %v1721
        %v1850 = vadd.f32 %v1141, %v1722
        %v1851 = vadd.f32 %v1143, %v1723
        %v1852 = vadd.f32 %v1334, %v1724
        %v1853 = vadd.f32 %v1336, %v1725
        %v1854 = vadd.f32 %v1145, %v1726
        %v1855 = vadd.f32 %v1147, %v1727
        %v1856 = vadd.f32 %v1338, %v1728
        %v1857 = vadd.f32 %v1340, %v1729
        %v1858 = vadd.f32 %v1151, %v1730
        %v1859 = vadd.f32 %v1153, %v1731
        %v1860 = vadd.f32 %v1344, %v1732
        %v1861 = vadd.f32 %v1346, %v1733
        %v1862 = vadd.f32 %v1155, %v1734
        %v1863 = vadd.f32 %v1157, %v1735
        %v1864 = vadd.f32 %v1348, %v1736
        %v1865 = vadd.f32 %v1350, %v1737
        %v1866 = vadd.f32 %v1161, %v1738
        %v1867 = vadd.f32 %v1163, %v1739
        %v1868 = vadd.f32 %v1354, %v1740
        %v1869 = vadd.f32 %v1356, %v1741
        %v1870 = vadd.f32 %v1165, %v1742
        %v1871 = vadd.f32 %v1167, %v1743
        %v1872 = vadd.f32 %v1358, %v1744
        %v1873 = vadd.f32 %v1360, %v1745
        %v1874 = vmul.f32 %v1746, 0.7978846
        %v1875 = vmul.f32 %v1747, 0.7978846
        %v1876 = vmul.f32 %v1748, 0.7978846
        %v1877 = vmul.f32 %v1749, 0.7978846
        %v1878 = vmul.f32 %v1750, 0.7978846
        %v1879 = vmul.f32 %v1751, 0.7978846
        %v1880 = vmul.f32 %v1752, 0.7978846
        %v1881 = vmul.f32 %v1753, 0.7978846
        %v1882 = vmul.f32 %v1754, 0.7978846
        %v1883 = vmul.f32 %v1755, 0.7978846
        %v1884 = vmul.f32 %v1756, 0.7978846
        %v1885 = vmul.f32 %v1757, 0.7978846
        %v1886 = vmul.f32 %v1758, 0.7978846
        %v1887 = vmul.f32 %v1759, 0.7978846
        %v1888 = vmul.f32 %v1760, 0.7978846
        %v1889 = vmul.f32 %v1761, 0.7978846
        %v1890 = vmul.f32 %v1762, 0.7978846
        %v1891 = vmul.f32 %v1763, 0.7978846
        %v1892 = vmul.f32 %v1764, 0.7978846
        %v1893 = vmul.f32 %v1765, 0.7978846
        %v1894 = vmul.f32 %v1766, 0.7978846
        %v1895 = vmul.f32 %v1767, 0.7978846
        %v1896 = vmul.f32 %v1768, 0.7978846
        %v1897 = vmul.f32 %v1769, 0.7978846
        %v1898 = vmul.f32 %v1770, 0.7978846
        %v1899 = vmul.f32 %v1771, 0.7978846
        %v1900 = vmul.f32 %v1772, 0.7978846
        %v1901 = vmul.f32 %v1773, 0.7978846
        %v1902 = vmul.f32 %v1774, 0.7978846
        %v1903 = vmul.f32 %v1775, 0.7978846
        %v1904 = vmul.f32 %v1776, 0.7978846
        %v1905 = vmul.f32 %v1777, 0.7978846
        %v1906 = vmul.f32 %v1778, 0.7978846
        %v1907 = vmul.f32 %v1779, 0.7978846
        %v1908 = vmul.f32 %v1780, 0.7978846
        %v1909 = vmul.f32 %v1781, 0.7978846
        %v1910 = vmul.f32 %v1782, 0.7978846
        %v1911 = vmul.f32 %v1783, 0.7978846
        %v1912 = vmul.f32 %v1784, 0.7978846
        %v1913 = vmul.f32 %v1785, 0.7978846
        %v1914 = vmul.f32 %v1786, 0.7978846
        %v1915 = vmul.f32 %v1787, 0.7978846
        %v1916 = vmul.f32 %v1788, 0.7978846
        %v1917 = vmul.f32 %v1789, 0.7978846
        %v1918 = vmul.f32 %v1790, 0.7978846
        %v1919 = vmul.f32 %v1791, 0.7978846
        %v1920 = vmul.f32 %v1792, 0.7978846
        %v1921 = vmul.f32 %v1793, 0.7978846
        %v1922 = vmul.f32 %v1794, 0.7978846
        %v1923 = vmul.f32 %v1795, 0.7978846
        %v1924 = vmul.f32 %v1796, 0.7978846
        %v1925 = vmul.f32 %v1797, 0.7978846
        %v1926 = vmul.f32 %v1798, 0.7978846
        %v1927 = vmul.f32 %v1799, 0.7978846
        %v1928 = vmul.f32 %v1800, 0.7978846
        %v1929 = vmul.f32 %v1801, 0.7978846
        %v1930 = vmul.f32 %v1802, 0.7978846
        %v1931 = vmul.f32 %v1803, 0.7978846
        %v1932 = vmul.f32 %v1804, 0.7978846
        %v1933 = vmul.f32 %v1805, 0.7978846
        %v1934 = vmul.f32 %v1806, 0.7978846
        %v1935 = vmul.f32 %v1807, 0.7978846
        %v1936 = vmul.f32 %v1808, 0.7978846
        %v1937 = vmul.f32 %v1809, 0.7978846
        %v1938 = vmul.f32 %v1810, 0.7978846
        %v1939 = vmul.f32 %v1811, 0.7978846
        %v1940 = vmul.f32 %v1812, 0.7978846
        %v1941 = vmul.f32 %v1813, 0.7978846
        %v1942 = vmul.f32 %v1814, 0.7978846
        %v1943 = vmul.f32 %v1815, 0.7978846
        %v1944 = vmul.f32 %v1816, 0.7978846
        %v1945 = vmul.f32 %v1817, 0.7978846
        %v1946 = vmul.f32 %v1818, 0.7978846
        %v1947 = vmul.f32 %v1819, 0.7978846
        %v1948 = vmul.f32 %v1820, 0.7978846
        %v1949 = vmul.f32 %v1821, 0.7978846
        %v1950 = vmul.f32 %v1822, 0.7978846
        %v1951 = vmul.f32 %v1823, 0.7978846
        %v1952 = vmul.f32 %v1824, 0.7978846
        %v1953 = vmul.f32 %v1825, 0.7978846
        %v1954 = vmul.f32 %v1826, 0.7978846
        %v1955 = vmul.f32 %v1827, 0.7978846
        %v1956 = vmul.f32 %v1828, 0.7978846
        %v1957 = vmul.f32 %v1829, 0.7978846
        %v1958 = vmul.f32 %v1830, 0.7978846
        %v1959 = vmul.f32 %v1831, 0.7978846
        %v1960 = vmul.f32 %v1832, 0.7978846
        %v1961 = vmul.f32 %v1833, 0.7978846
        %v1962 = vmul.f32 %v1834, 0.7978846
        %v1963 = vmul.f32 %v1835, 0.7978846
        %v1964 = vmul.f32 %v1836, 0.7978846
        %v1965 = vmul.f32 %v1837, 0.7978846
        %v1966 = vmul.f32 %v1838, 0.7978846
        %v1967 = vmul.f32 %v1839, 0.7978846
        %v1968 = vmul.f32 %v1840, 0.7978846
        %v1969 = vmul.f32 %v1841, 0.7978846
        %v1970 = vmul.f32 %v1842, 0.7978846
        %v1971 = vmul.f32 %v1843, 0.7978846
        %v1972 = vmul.f32 %v1844, 0.7978846
        %v1973 = vmul.f32 %v1845, 0.7978846
        %v1974 = vmul.f32 %v1846, 0.7978846
        %v1975 = vmul.f32 %v1847, 0.7978846
        %v1976 = vmul.f32 %v1848, 0.7978846
        %v1977 = vmul.f32 %v1849, 0.7978846
        %v1978 = vmul.f32 %v1850, 0.7978846
        %v1979 = vmul.f32 %v1851, 0.7978846
        %v1980 = vmul.f32 %v1852, 0.7978846
        %v1981 = vmul.f32 %v1853, 0.7978846
        %v1982 = vmul.f32 %v1854, 0.7978846
        %v1983 = vmul.f32 %v1855, 0.7978846
        %v1984 = vmul.f32 %v1856, 0.7978846
        %v1985 = vmul.f32 %v1857, 0.7978846
        %v1986 = vmul.f32 %v1858, 0.7978846
        %v1987 = vmul.f32 %v1859, 0.7978846
        %v1988 = vmul.f32 %v1860, 0.7978846
        %v1989 = vmul.f32 %v1861, 0.7978846
        %v1990 = vmul.f32 %v1862, 0.7978846
        %v1991 = vmul.f32 %v1863, 0.7978846
        %v1992 = vmul.f32 %v1864, 0.7978846
        %v1993 = vmul.f32 %v1865, 0.7978846
        %v1994 = vmul.f32 %v1866, 0.7978846
        %v1995 = vmul.f32 %v1867, 0.7978846
        %v1996 = vmul.f32 %v1868, 0.7978846
        %v1997 = vmul.f32 %v1869, 0.7978846
        %v1998 = vmul.f32 %v1870, 0.7978846
        %v1999 = vmul.f32 %v1871, 0.7978846
        %v2000 = vmul.f32 %v1872, 0.7978846
        %v2001 = vmul.f32 %v1873, 0.7978846
        %v2002 = vtanh.pop %v1874
        %v2003 = vtanh.pop %v1875
        %v2004 = vtanh.pop %v1876
        %v2005 = vtanh.pop %v1877
        %v2006 = vtanh.pop %v1878
        %v2007 = vtanh.pop %v1879
        %v2008 = vtanh.pop %v1880
        %v2009 = vtanh.pop %v1881
        %v2010 = vtanh.pop %v1882
        %v2011 = vtanh.pop %v1883
        %v2012 = vtanh.pop %v1884
        %v2013 = vtanh.pop %v1885
        %v2014 = vtanh.pop %v1886
        %v2015 = vtanh.pop %v1887
        %v2016 = vtanh.pop %v1888
        %v2017 = vtanh.pop %v1889
        %v2018 = vtanh.pop %v1890
        %v2019 = vtanh.pop %v1891
        %v2020 = vtanh.pop %v1892
        %v2021 = vtanh.pop %v1893
        %v2022 = vtanh.pop %v1894
        %v2023 = vtanh.pop %v1895
        %v2024 = vtanh.pop %v1896
        %v2025 = vtanh.pop %v1897
        %v2026 = vtanh.pop %v1898
        %v2027 = vtanh.pop %v1899
        %v2028 = vtanh.pop %v1900
        %v2029 = vtanh.pop %v1901
        %v2030 = vtanh.pop %v1902
        %v2031 = vtanh.pop %v1903
        %v2032 = vtanh.pop %v1904
        %v2033 = vtanh.pop %v1905
        %v2034 = vtanh.pop %v1906
        %v2035 = vtanh.pop %v1907
        %v2036 = vtanh.pop %v1908
        %v2037 = vtanh.pop %v1909
        %v2038 = vtanh.pop %v1910
        %v2039 = vtanh.pop %v1911
        %v2040 = vtanh.pop %v1912
        %v2041 = vtanh.pop %v1913
        %v2042 = vtanh.pop %v1914
        %v2043 = vtanh.pop %v1915
        %v2044 = vtanh.pop %v1916
        %v2045 = vtanh.pop %v1917
        %v2046 = vtanh.pop %v1918
        %v2047 = vtanh.pop %v1919
        %v2048 = vtanh.pop %v1920
        %v2049 = vtanh.pop %v1921
        %v2050 = vtanh.pop %v1922
        %v2051 = vtanh.pop %v1923
        %v2052 = vtanh.pop %v1924
        %v2053 = vtanh.pop %v1925
        %v2054 = vtanh.pop %v1926
        %v2055 = vtanh.pop %v1927
        %v2056 = vtanh.pop %v1928
        %v2057 = vtanh.pop %v1929
        %v2058 = vtanh.pop %v1930
        %v2059 = vtanh.pop %v1931
        %v2060 = vtanh.pop %v1932
        %v2061 = vtanh.pop %v1933
        %v2062 = vtanh.pop %v1934
        %v2063 = vtanh.pop %v1935
        %v2064 = vtanh.pop %v1936
        %v2065 = vtanh.pop %v1937
        %v2066 = vtanh.pop %v1938
        %v2067 = vtanh.pop %v1939
        %v2068 = vtanh.pop %v1940
        %v2069 = vtanh.pop %v1941
        %v2070 = vtanh.pop %v1942
        %v2071 = vtanh.pop %v1943
        %v2072 = vtanh.pop %v1944
        %v2073 = vtanh.pop %v1945
        %v2074 = vtanh.pop %v1946
        %v2075 = vtanh.pop %v1947
        %v2076 = vtanh.pop %v1948
        %v2077 = vtanh.pop %v1949
        %v2078 = vtanh.pop %v1950
        %v2079 = vtanh.pop %v1951
        %v2080 = vtanh.pop %v1952
        %v2081 = vtanh.pop %v1953
        %v2082 = vtanh.pop %v1954
        %v2083 = vtanh.pop %v1955
        %v2084 = vtanh.pop %v1956
        %v2085 = vtanh.pop %v1957
        %v2086 = vtanh.pop %v1958
        %v2087 = vtanh.pop %v1959
        %v2088 = vtanh.pop %v1960
        %v2089 = vtanh.pop %v1961
        %v2090 = vtanh.pop %v1962
        %v2091 = vtanh.pop %v1963
        %v2092 = vtanh.pop %v1964
        %v2093 = vtanh.pop %v1965
        %v2094 = vtanh.pop %v1966
        %v2095 = vtanh.pop %v1967
        %v2096 = vtanh.pop %v1968
        %v2097 = vtanh.pop %v1969
        %v2098 = vtanh.pop %v1970
        %v2099 = vtanh.pop %v1971
        %v2100 = vtanh.pop %v1972
        %v2101 = vtanh.pop %v1973
        %v2102 = vtanh.pop %v1974
        %v2103 = vtanh.pop %v1975
        %v2104 = vtanh.pop %v1976
        %v2105 = vtanh.pop %v1977
        %v2106 = vtanh.pop %v1978
        %v2107 = vtanh.pop %v1979
        %v2108 = vtanh.pop %v1980
        %v2109 = vtanh.pop %v1981
        %v2110 = vtanh.pop %v1982
        %v2111 = vtanh.pop %v1983
        %v2112 = vtanh.pop %v1984
        %v2113 = vtanh.pop %v1985
        %v2114 = vtanh.pop %v1986
        %v2115 = vtanh.pop %v1987
        %v2116 = vtanh.pop %v1988
        %v2117 = vtanh.pop %v1989
        %v2118 = vtanh.pop %v1990
        %v2119 = vtanh.pop %v1991
        %v2120 = vtanh.pop %v1992
        %v2121 = vtanh.pop %v1993
        %v2122 = vtanh.pop %v1994
        %v2123 = vtanh.pop %v1995
        %v2124 = vtanh.pop %v1996
        %v2125 = vtanh.pop %v1997
        %v2126 = vtanh.pop %v1998
        %v2127 = vtanh.pop %v1999
        %v2128 = vtanh.pop %v2000
        %v2129 = vtanh.pop %v2001
        %v2130 = vadd.f32 %v2002, 1.0
        %v2131 = vadd.f32 %v2003, 1.0
        %v2132 = vadd.f32 %v2004, 1.0
        %v2133 = vadd.f32 %v2005, 1.0
        %v2134 = vadd.f32 %v2006, 1.0
        %v2135 = vadd.f32 %v2007, 1.0
        %v2136 = vadd.f32 %v2008, 1.0
        %v2137 = vadd.f32 %v2009, 1.0
        %v2138 = vadd.f32 %v2010, 1.0
        %v2139 = vadd.f32 %v2011, 1.0
        %v2140 = vadd.f32 %v2012, 1.0
        %v2141 = vadd.f32 %v2013, 1.0
        %v2142 = vadd.f32 %v2014, 1.0
        %v2143 = vadd.f32 %v2015, 1.0
        %v2144 = vadd.f32 %v2016, 1.0
        %v2145 = vadd.f32 %v2017, 1.0
        %v2146 = vadd.f32 %v2018, 1.0
        %v2147 = vadd.f32 %v2019, 1.0
        %v2148 = vadd.f32 %v2020, 1.0
        %v2149 = vadd.f32 %v2021, 1.0
        %v2150 = vadd.f32 %v2022, 1.0
        %v2151 = vadd.f32 %v2023, 1.0
        %v2152 = vadd.f32 %v2024, 1.0
        %v2153 = vadd.f32 %v2025, 1.0
        %v2154 = vadd.f32 %v2026, 1.0
        %v2155 = vadd.f32 %v2027, 1.0
        %v2156 = vadd.f32 %v2028, 1.0
        %v2157 = vadd.f32 %v2029, 1.0
        %v2158 = vadd.f32 %v2030, 1.0
        %v2159 = vadd.f32 %v2031, 1.0
        %v2160 = vadd.f32 %v2032, 1.0
        %v2161 = vadd.f32 %v2033, 1.0
        %v2162 = vadd.f32 %v2034, 1.0
        %v2163 = vadd.f32 %v2035, 1.0
        %v2164 = vadd.f32 %v2036, 1.0
        %v2165 = vadd.f32 %v2037, 1.0
        %v2166 = vadd.f32 %v2038, 1.0
        %v2167 = vadd.f32 %v2039, 1.0
        %v2168 = vadd.f32 %v2040, 1.0
        %v2169 = vadd.f32 %v2041, 1.0
        %v2170 = vadd.f32 %v2042, 1.0
        %v2171 = vadd.f32 %v2043, 1.0
        %v2172 = vadd.f32 %v2044, 1.0
        %v2173 = vadd.f32 %v2045, 1.0
        %v2174 = vadd.f32 %v2046, 1.0
        %v2175 = vadd.f32 %v2047, 1.0
        %v2176 = vadd.f32 %v2048, 1.0
        %v2177 = vadd.f32 %v2049, 1.0
        %v2178 = vadd.f32 %v2050, 1.0
        %v2179 = vadd.f32 %v2051, 1.0
        %v2180 = vadd.f32 %v2052, 1.0
        %v2181 = vadd.f32 %v2053, 1.0
        %v2182 = vadd.f32 %v2054, 1.0
        %v2183 = vadd.f32 %v2055, 1.0
        %v2184 = vadd.f32 %v2056, 1.0
        %v2185 = vadd.f32 %v2057, 1.0
        %v2186 = vadd.f32 %v2058, 1.0
        %v2187 = vadd.f32 %v2059, 1.0
        %v2188 = vadd.f32 %v2060, 1.0
        %v2189 = vadd.f32 %v2061, 1.0
        %v2190 = vadd.f32 %v2062, 1.0
        %v2191 = vadd.f32 %v2063, 1.0
        %v2192 = vadd.f32 %v2064, 1.0
        %v2193 = vadd.f32 %v2065, 1.0
        %v2194 = vadd.f32 %v2066, 1.0
        %v2195 = vadd.f32 %v2067, 1.0
        %v2196 = vadd.f32 %v2068, 1.0
        %v2197 = vadd.f32 %v2069, 1.0
        %v2198 = vadd.f32 %v2070, 1.0
        %v2199 = vadd.f32 %v2071, 1.0
        %v2200 = vadd.f32 %v2072, 1.0
        %v2201 = vadd.f32 %v2073, 1.0
        %v2202 = vadd.f32 %v2074, 1.0
        %v2203 = vadd.f32 %v2075, 1.0
        %v2204 = vadd.f32 %v2076, 1.0
        %v2205 = vadd.f32 %v2077, 1.0
        %v2206 = vadd.f32 %v2078, 1.0
        %v2207 = vadd.f32 %v2079, 1.0
        %v2208 = vadd.f32 %v2080, 1.0
        %v2209 = vadd.f32 %v2081, 1.0
        %v2210 = vadd.f32 %v2082, 1.0
        %v2211 = vadd.f32 %v2083, 1.0
        %v2212 = vadd.f32 %v2084, 1.0
        %v2213 = vadd.f32 %v2085, 1.0
        %v2214 = vadd.f32 %v2086, 1.0
        %v2215 = vadd.f32 %v2087, 1.0
        %v2216 = vadd.f32 %v2088, 1.0
        %v2217 = vadd.f32 %v2089, 1.0
        %v2218 = vadd.f32 %v2090, 1.0
        %v2219 = vadd.f32 %v2091, 1.0
        %v2220 = vadd.f32 %v2092, 1.0
        %v2221 = vadd.f32 %v2093, 1.0
        %v2222 = vadd.f32 %v2094, 1.0
        %v2223 = vadd.f32 %v2095, 1.0
        %v2224 = vadd.f32 %v2096, 1.0
        %v2225 = vadd.f32 %v2097, 1.0
        %v2226 = vadd.f32 %v2098, 1.0
        %v2227 = vadd.f32 %v2099, 1.0
        %v2228 = vadd.f32 %v2100, 1.0
        %v2229 = vadd.f32 %v2101, 1.0
        %v2230 = vadd.f32 %v2102, 1.0
        %v2231 = vadd.f32 %v2103, 1.0
        %v2232 = vadd.f32 %v2104, 1.0
        %v2233 = vadd.f32 %v2105, 1.0
        %v2234 = vadd.f32 %v2106, 1.0
        %v2235 = vadd.f32 %v2107, 1.0
        %v2236 = vadd.f32 %v2108, 1.0
        %v2237 = vadd.f32 %v2109, 1.0
        %v2238 = vadd.f32 %v2110, 1.0
        %v2239 = vadd.f32 %v2111, 1.0
        %v2240 = vadd.f32 %v2112, 1.0
        %v2241 = vadd.f32 %v2113, 1.0
        %v2242 = vadd.f32 %v2114, 1.0
        %v2243 = vadd.f32 %v2115, 1.0
        %v2244 = vadd.f32 %v2116, 1.0
        %v2245 = vadd.f32 %v2117, 1.0
        %v2246 = vadd.f32 %v2118, 1.0
        %v2247 = vadd.f32 %v2119, 1.0
        %v2248 = vadd.f32 %v2120, 1.0
        %v2249 = vadd.f32 %v2121, 1.0
        %v2250 = vadd.f32 %v2122, 1.0
        %v2251 = vadd.f32 %v2123, 1.0
        %v2252 = vadd.f32 %v2124, 1.0
        %v2253 = vadd.f32 %v2125, 1.0
        %v2254 = vadd.f32 %v2126, 1.0
        %v2255 = vadd.f32 %v2127, 1.0
        %v2256 = vadd.f32 %v2128, 1.0
        %v2257 = vadd.f32 %v2129, 1.0
        %v2258 = vmul.f32 %v2130, 0.5
        %v2259 = vmul.f32 %v2131, 0.5
        %v2260 = vmul.f32 %v2132, 0.5
        %v2261 = vmul.f32 %v2133, 0.5
        %v2262 = vmul.f32 %v2134, 0.5
        %v2263 = vmul.f32 %v2135, 0.5
        %v2264 = vmul.f32 %v2136, 0.5
        %v2265 = vmul.f32 %v2137, 0.5
        %v2266 = vmul.f32 %v2138, 0.5
        %v2267 = vmul.f32 %v2139, 0.5
        %v2268 = vmul.f32 %v2140, 0.5
        %v2269 = vmul.f32 %v2141, 0.5
        %v2270 = vmul.f32 %v2142, 0.5
        %v2271 = vmul.f32 %v2143, 0.5
        %v2272 = vmul.f32 %v2144, 0.5
        %v2273 = vmul.f32 %v2145, 0.5
        %v2274 = vmul.f32 %v2146, 0.5
        %v2275 = vmul.f32 %v2147, 0.5
        %v2276 = vmul.f32 %v2148, 0.5
        %v2277 = vmul.f32 %v2149, 0.5
        %v2278 = vmul.f32 %v2150, 0.5
        %v2279 = vmul.f32 %v2151, 0.5
        %v2280 = vmul.f32 %v2152, 0.5
        %v2281 = vmul.f32 %v2153, 0.5
        %v2282 = vmul.f32 %v2154, 0.5
        %v2283 = vmul.f32 %v2155, 0.5
        %v2284 = vmul.f32 %v2156, 0.5
        %v2285 = vmul.f32 %v2157, 0.5
        %v2286 = vmul.f32 %v2158, 0.5
        %v2287 = vmul.f32 %v2159, 0.5
        %v2288 = vmul.f32 %v2160, 0.5
        %v2289 = vmul.f32 %v2161, 0.5
        %v2290 = vmul.f32 %v2162, 0.5
        %v2291 = vmul.f32 %v2163, 0.5
        %v2292 = vmul.f32 %v2164, 0.5
        %v2293 = vmul.f32 %v2165, 0.5
        %v2294 = vmul.f32 %v2166, 0.5
        %v2295 = vmul.f32 %v2167, 0.5
        %v2296 = vmul.f32 %v2168, 0.5
        %v2297 = vmul.f32 %v2169, 0.5
        %v2298 = vmul.f32 %v2170, 0.5
        %v2299 = vmul.f32 %v2171, 0.5
        %v2300 = vmul.f32 %v2172, 0.5
        %v2301 = vmul.f32 %v2173, 0.5
        %v2302 = vmul.f32 %v2174, 0.5
        %v2303 = vmul.f32 %v2175, 0.5
        %v2304 = vmul.f32 %v2176, 0.5
        %v2305 = vmul.f32 %v2177, 0.5
        %v2306 = vmul.f32 %v2178, 0.5
        %v2307 = vmul.f32 %v2179, 0.5
        %v2308 = vmul.f32 %v2180, 0.5
        %v2309 = vmul.f32 %v2181, 0.5
        %v2310 = vmul.f32 %v2182, 0.5
        %v2311 = vmul.f32 %v2183, 0.5
        %v2312 = vmul.f32 %v2184, 0.5
        %v2313 = vmul.f32 %v2185, 0.5
        %v2314 = vmul.f32 %v2186, 0.5
        %v2315 = vmul.f32 %v2187, 0.5
        %v2316 = vmul.f32 %v2188, 0.5
        %v2317 = vmul.f32 %v2189, 0.5
        %v2318 = vmul.f32 %v2190, 0.5
        %v2319 = vmul.f32 %v2191, 0.5
        %v2320 = vmul.f32 %v2192, 0.5
        %v2321 = vmul.f32 %v2193, 0.5
        %v2322 = vmul.f32 %v2194, 0.5
        %v2323 = vmul.f32 %v2195, 0.5
        %v2324 = vmul.f32 %v2196, 0.5
        %v2325 = vmul.f32 %v2197, 0.5
        %v2326 = vmul.f32 %v2198, 0.5
        %v2327 = vmul.f32 %v2199, 0.5
        %v2328 = vmul.f32 %v2200, 0.5
        %v2329 = vmul.f32 %v2201, 0.5
        %v2330 = vmul.f32 %v2202, 0.5
        %v2331 = vmul.f32 %v2203, 0.5
        %v2332 = vmul.f32 %v2204, 0.5
        %v2333 = vmul.f32 %v2205, 0.5
        %v2334 = vmul.f32 %v2206, 0.5
        %v2335 = vmul.f32 %v2207, 0.5
        %v2336 = vmul.f32 %v2208, 0.5
        %v2337 = vmul.f32 %v2209, 0.5
        %v2338 = vmul.f32 %v2210, 0.5
        %v2339 = vmul.f32 %v2211, 0.5
        %v2340 = vmul.f32 %v2212, 0.5
        %v2341 = vmul.f32 %v2213, 0.5
        %v2342 = vmul.f32 %v2214, 0.5
        %v2343 = vmul.f32 %v2215, 0.5
        %v2344 = vmul.f32 %v2216, 0.5
        %v2345 = vmul.f32 %v2217, 0.5
        %v2346 = vmul.f32 %v2218, 0.5
        %v2347 = vmul.f32 %v2219, 0.5
        %v2348 = vmul.f32 %v2220, 0.5
        %v2349 = vmul.f32 %v2221, 0.5
        %v2350 = vmul.f32 %v2222, 0.5
        %v2351 = vmul.f32 %v2223, 0.5
        %v2352 = vmul.f32 %v2224, 0.5
        %v2353 = vmul.f32 %v2225, 0.5
        %v2354 = vmul.f32 %v2226, 0.5
        %v2355 = vmul.f32 %v2227, 0.5
        %v2356 = vmul.f32 %v2228, 0.5
        %v2357 = vmul.f32 %v2229, 0.5
        %v2358 = vmul.f32 %v2230, 0.5
        %v2359 = vmul.f32 %v2231, 0.5
        %v2360 = vmul.f32 %v2232, 0.5
        %v2361 = vmul.f32 %v2233, 0.5
        %v2362 = vmul.f32 %v2234, 0.5
        %v2363 = vmul.f32 %v2235, 0.5
        %v2364 = vmul.f32 %v2236, 0.5
        %v2365 = vmul.f32 %v2237, 0.5
        %v2366 = vmul.f32 %v2238, 0.5
        %v2367 = vmul.f32 %v2239, 0.5
        %v2368 = vmul.f32 %v2240, 0.5
        %v2369 = vmul.f32 %v2241, 0.5
        %v2370 = vmul.f32 %v2242, 0.5
        %v2371 = vmul.f32 %v2243, 0.5
        %v2372 = vmul.f32 %v2244, 0.5
        %v2373 = vmul.f32 %v2245, 0.5
        %v2374 = vmul.f32 %v2246, 0.5
        %v2375 = vmul.f32 %v2247, 0.5
        %v2376 = vmul.f32 %v2248, 0.5
        %v2377 = vmul.f32 %v2249, 0.5
        %v2378 = vmul.f32 %v2250, 0.5
        %v2379 = vmul.f32 %v2251, 0.5
        %v2380 = vmul.f32 %v2252, 0.5
        %v2381 = vmul.f32 %v2253, 0.5
        %v2382 = vmul.f32 %v2254, 0.5
        %v2383 = vmul.f32 %v2255, 0.5
        %v2384 = vmul.f32 %v2256, 0.5
        %v2385 = vmul.f32 %v2257, 0.5
        %v2386 = vmul.f32 %v1011, %v2258
        %v2387 = vmul.f32 %v1013, %v2259
        %v2388 = vmul.f32 %v1204, %v2260
        %v2389 = vmul.f32 %v1206, %v2261
        %v2390 = vmul.f32 %v1015, %v2262
        %v2391 = vmul.f32 %v1017, %v2263
        %v2392 = vmul.f32 %v1208, %v2264
        %v2393 = vmul.f32 %v1210, %v2265
        %v2394 = vmul.f32 %v1021, %v2266
        %v2395 = vmul.f32 %v1023, %v2267
        %v2396 = vmul.f32 %v1214, %v2268
        %v2397 = vmul.f32 %v1216, %v2269
        %v2398 = vmul.f32 %v1025, %v2270
        %v2399 = vmul.f32 %v1027, %v2271
        %v2400 = vmul.f32 %v1218, %v2272
        %v2401 = vmul.f32 %v1220, %v2273
        %v2402 = vmul.f32 %v1031, %v2274
        %v2403 = vmul.f32 %v1033, %v2275
        %v2404 = vmul.f32 %v1224, %v2276
        %v2405 = vmul.f32 %v1226, %v2277
        %v2406 = vmul.f32 %v1035, %v2278
        %v2407 = vmul.f32 %v1037, %v2279
        %v2408 = vmul.f32 %v1228, %v2280
        %v2409 = vmul.f32 %v1230, %v2281
        %v2410 = vmul.f32 %v1041, %v2282
        %v2411 = vmul.f32 %v1043, %v2283
        %v2412 = vmul.f32 %v1234, %v2284
        %v2413 = vmul.f32 %v1236, %v2285
        %v2414 = vmul.f32 %v1045, %v2286
        %v2415 = vmul.f32 %v1047, %v2287
        %v2416 = vmul.f32 %v1238, %v2288
        %v2417 = vmul.f32 %v1240, %v2289
        %v2418 = vmul.f32 %v1051, %v2290
        %v2419 = vmul.f32 %v1053, %v2291
        %v2420 = vmul.f32 %v1244, %v2292
        %v2421 = vmul.f32 %v1246, %v2293
        %v2422 = vmul.f32 %v1055, %v2294
        %v2423 = vmul.f32 %v1057, %v2295
        %v2424 = vmul.f32 %v1248, %v2296
        %v2425 = vmul.f32 %v1250, %v2297
        %v2426 = vmul.f32 %v1061, %v2298
        %v2427 = vmul.f32 %v1063, %v2299
        %v2428 = vmul.f32 %v1254, %v2300
        %v2429 = vmul.f32 %v1256, %v2301
        %v2430 = vmul.f32 %v1065, %v2302
        %v2431 = vmul.f32 %v1067, %v2303
        %v2432 = vmul.f32 %v1258, %v2304
        %v2433 = vmul.f32 %v1260, %v2305
        %v2434 = vmul.f32 %v1071, %v2306
        %v2435 = vmul.f32 %v1073, %v2307
        %v2436 = vmul.f32 %v1264, %v2308
        %v2437 = vmul.f32 %v1266, %v2309
        %v2438 = vmul.f32 %v1075, %v2310
        %v2439 = vmul.f32 %v1077, %v2311
        %v2440 = vmul.f32 %v1268, %v2312
        %v2441 = vmul.f32 %v1270, %v2313
        %v2442 = vmul.f32 %v1081, %v2314
        %v2443 = vmul.f32 %v1083, %v2315
        %v2444 = vmul.f32 %v1274, %v2316
        %v2445 = vmul.f32 %v1276, %v2317
        %v2446 = vmul.f32 %v1085, %v2318
        %v2447 = vmul.f32 %v1087, %v2319
        %v2448 = vmul.f32 %v1278, %v2320
        %v2449 = vmul.f32 %v1280, %v2321
        %v2450 = vmul.f32 %v1091, %v2322
        %v2451 = vmul.f32 %v1093, %v2323
        %v2452 = vmul.f32 %v1284, %v2324
        %v2453 = vmul.f32 %v1286, %v2325
        %v2454 = vmul.f32 %v1095, %v2326
        %v2455 = vmul.f32 %v1097, %v2327
        %v2456 = vmul.f32 %v1288, %v2328
        %v2457 = vmul.f32 %v1290, %v2329
        %v2458 = vmul.f32 %v1101, %v2330
        %v2459 = vmul.f32 %v1103, %v2331
        %v2460 = vmul.f32 %v1294, %v2332
        %v2461 = vmul.f32 %v1296, %v2333
        %v2462 = vmul.f32 %v1105, %v2334
        %v2463 = vmul.f32 %v1107, %v2335
        %v2464 = vmul.f32 %v1298, %v2336
        %v2465 = vmul.f32 %v1300, %v2337
        %v2466 = vmul.f32 %v1111, %v2338
        %v2467 = vmul.f32 %v1113, %v2339
        %v2468 = vmul.f32 %v1304, %v2340
        %v2469 = vmul.f32 %v1306, %v2341
        %v2470 = vmul.f32 %v1115, %v2342
        %v2471 = vmul.f32 %v1117, %v2343
        %v2472 = vmul.f32 %v1308, %v2344
        %v2473 = vmul.f32 %v1310, %v2345
        %v2474 = vmul.f32 %v1121, %v2346
        %v2475 = vmul.f32 %v1123, %v2347
        %v2476 = vmul.f32 %v1314, %v2348
        %v2477 = vmul.f32 %v1316, %v2349
        %v2478 = vmul.f32 %v1125, %v2350
        %v2479 = vmul.f32 %v1127, %v2351
        %v2480 = vmul.f32 %v1318, %v2352
        %v2481 = vmul.f32 %v1320, %v2353
        %v2482 = vmul.f32 %v1131, %v2354
        %v2483 = vmul.f32 %v1133, %v2355
        %v2484 = vmul.f32 %v1324, %v2356
        %v2485 = vmul.f32 %v1326, %v2357
        %v2486 = vmul.f32 %v1135, %v2358
        %v2487 = vmul.f32 %v1137, %v2359
        %v2488 = vmul.f32 %v1328, %v2360
        %v2489 = vmul.f32 %v1330, %v2361
        %v2490 = vmul.f32 %v1141, %v2362
        %v2491 = vmul.f32 %v1143, %v2363
        %v2492 = vmul.f32 %v1334, %v2364
        %v2493 = vmul.f32 %v1336, %v2365
        %v2494 = vmul.f32 %v1145, %v2366
        %v2495 = vmul.f32 %v1147, %v2367
        %v2496 = vmul.f32 %v1338, %v2368
        %v2497 = vmul.f32 %v1340, %v2369
        %v2498 = vmul.f32 %v1151, %v2370
        %v2499 = vmul.f32 %v1153, %v2371
        %v2500 = vmul.f32 %v1344, %v2372
        %v2501 = vmul.f32 %v1346, %v2373
        %v2502 = vmul.f32 %v1155, %v2374
        %v2503 = vmul.f32 %v1157, %v2375
        %v2504 = vmul.f32 %v1348, %v2376
        %v2505 = vmul.f32 %v1350, %v2377
        %v2506 = vmul.f32 %v1161, %v2378
        %v2507 = vmul.f32 %v1163, %v2379
        %v2508 = vmul.f32 %v1354, %v2380
        %v2509 = vmul.f32 %v1356, %v2381
        %v2510 = vmul.f32 %v1165, %v2382
        %v2511 = vmul.f32 %v1167, %v2383
        %v2512 = vmul.f32 %v1358, %v2384
        %v2513 = vmul.f32 %v1360, %v2385
        %v2514 = vpack.c.bf16 %v2390, %v2386
        %v2515 = vpack.c.bf16 %v2391, %v2387
        %v2516 = vpack.c.bf16 %v2392, %v2388
        %v2517 = vpack.c.bf16 %v2393, %v2389
        %v2518 = vpack.c.bf16 %v2398, %v2394
        %v2519 = vpack.c.bf16 %v2399, %v2395
        %v2520 = vpack.c.bf16 %v2400, %v2396
        %v2521 = vpack.c.bf16 %v2401, %v2397
        %v2522 = vpack.c.bf16 %v2406, %v2402
        %v2523 = vpack.c.bf16 %v2407, %v2403
        %v2524 = vpack.c.bf16 %v2408, %v2404
        %v2525 = vpack.c.bf16 %v2409, %v2405
        %v2526 = vpack.c.bf16 %v2414, %v2410
        %v2527 = vpack.c.bf16 %v2415, %v2411
        %v2528 = vpack.c.bf16 %v2416, %v2412
        %v2529 = vpack.c.bf16 %v2417, %v2413
        %v2530 = vpack.c.bf16 %v2422, %v2418
        %v2531 = vpack.c.bf16 %v2423, %v2419
        %v2532 = vpack.c.bf16 %v2424, %v2420
        %v2533 = vpack.c.bf16 %v2425, %v2421
        %v2534 = vpack.c.bf16 %v2430, %v2426
        %v2535 = vpack.c.bf16 %v2431, %v2427
        %v2536 = vpack.c.bf16 %v2432, %v2428
        %v2537 = vpack.c.bf16 %v2433, %v2429
        %v2538 = vpack.c.bf16 %v2438, %v2434
        %v2539 = vpack.c.bf16 %v2439, %v2435
        %v2540 = vpack.c.bf16 %v2440, %v2436
        %v2541 = vpack.c.bf16 %v2441, %v2437
        %v2542 = vpack.c.bf16 %v2446, %v2442
        %v2543 = vpack.c.bf16 %v2447, %v2443
        %v2544 = vpack.c.bf16 %v2448, %v2444
        %v2545 = vpack.c.bf16 %v2449, %v2445
        %v2546 = vpack.c.bf16 %v2454, %v2450
        %v2547 = vpack.c.bf16 %v2455, %v2451
        %v2548 = vpack.c.bf16 %v2456, %v2452
        %v2549 = vpack.c.bf16 %v2457, %v2453
        %v2550 = vpack.c.bf16 %v2462, %v2458
        %v2551 = vpack.c.bf16 %v2463, %v2459
        %v2552 = vpack.c.bf16 %v2464, %v2460
        %v2553 = vpack.c.bf16 %v2465, %v2461
        %v2554 = vpack.c.bf16 %v2470, %v2466
        %v2555 = vpack.c.bf16 %v2471, %v2467
        %v2556 = vpack.c.bf16 %v2472, %v2468
        %v2557 = vpack.c.bf16 %v2473, %v2469
        %v2558 = vpack.c.bf16 %v2478, %v2474
        %v2559 = vpack.c.bf16 %v2479, %v2475
        %v2560 = vpack.c.bf16 %v2480, %v2476
        %v2561 = vpack.c.bf16 %v2481, %v2477
        %v2562 = vpack.c.bf16 %v2486, %v2482
        %v2563 = vpack.c.bf16 %v2487, %v2483
        %v2564 = vpack.c.bf16 %v2488, %v2484
        %v2565 = vpack.c.bf16 %v2489, %v2485
        %v2566 = vpack.c.bf16 %v2494, %v2490
        %v2567 = vpack.c.bf16 %v2495, %v2491
        %v2568 = vpack.c.bf16 %v2496, %v2492
        %v2569 = vpack.c.bf16 %v2497, %v2493
        %v2570 = vpack.c.bf16 %v2502, %v2498
        %v2571 = vpack.c.bf16 %v2503, %v2499
        %v2572 = vpack.c.bf16 %v2504, %v2500
        %v2573 = vpack.c.bf16 %v2505, %v2501
        %v2574 = vpack.c.bf16 %v2510, %v2506
        %v2575 = vpack.c.bf16 %v2511, %v2507
        %v2576 = vpack.c.bf16 %v2512, %v2508
        %v2577 = vpack.c.bf16 %v2513, %v2509
        %v2610 = vunpack.c.l.b16 %v2514
        %v2611 = vunpack.c.l.b16 %v2515
        %v2612 = vunpack.c.l.b16 %v2516
        %v2613 = vunpack.c.l.b16 %v2517
        %v2614 = vunpack.c.h.b16 %v2514
        %v2615 = vunpack.c.h.b16 %v2515
        %v2616 = vunpack.c.h.b16 %v2516
        %v2617 = vunpack.c.h.b16 %v2517
        %v2618 = vunpack.c.l.b16 %v2518
        %v2619 = vunpack.c.l.b16 %v2519
        %v2620 = vunpack.c.l.b16 %v2520
        %v2621 = vunpack.c.l.b16 %v2521
        %v2622 = vunpack.c.h.b16 %v2518
        %v2623 = vunpack.c.h.b16 %v2519
        %v2624 = vunpack.c.h.b16 %v2520
        %v2625 = vunpack.c.h.b16 %v2521
        %v2626 = vunpack.c.l.b16 %v2522
        %v2627 = vunpack.c.l.b16 %v2523
        %v2628 = vunpack.c.l.b16 %v2524
        %v2629 = vunpack.c.l.b16 %v2525
        %v2630 = vunpack.c.h.b16 %v2522
        %v2631 = vunpack.c.h.b16 %v2523
        %v2632 = vunpack.c.h.b16 %v2524
        %v2633 = vunpack.c.h.b16 %v2525
        %v2634 = vunpack.c.l.b16 %v2526
        %v2635 = vunpack.c.l.b16 %v2527
        %v2636 = vunpack.c.l.b16 %v2528
        %v2637 = vunpack.c.l.b16 %v2529
        %v2638 = vunpack.c.h.b16 %v2526
        %v2639 = vunpack.c.h.b16 %v2527
        %v2640 = vunpack.c.h.b16 %v2528
        %v2641 = vunpack.c.h.b16 %v2529
        %v2642 = vunpack.c.l.b16 %v2530
        %v2643 = vunpack.c.l.b16 %v2531
        %v2644 = vunpack.c.l.b16 %v2532
        %v2645 = vunpack.c.l.b16 %v2533
        %v2646 = vunpack.c.h.b16 %v2530
        %v2647 = vunpack.c.h.b16 %v2531
        %v2648 = vunpack.c.h.b16 %v2532
        %v2649 = vunpack.c.h.b16 %v2533
        %v2650 = vunpack.c.l.b16 %v2534
        %v2651 = vunpack.c.l.b16 %v2535
        %v2652 = vunpack.c.l.b16 %v2536
        %v2653 = vunpack.c.l.b16 %v2537
        %v2654 = vunpack.c.h.b16 %v2534
        %v2655 = vunpack.c.h.b16 %v2535
        %v2656 = vunpack.c.h.b16 %v2536
        %v2657 = vunpack.c.h.b16 %v2537
        %v2658 = vunpack.c.l.b16 %v2538
        %v2659 = vunpack.c.l.b16 %v2539
        %v2660 = vunpack.c.l.b16 %v2540
        %v2661 = vunpack.c.l.b16 %v2541
        %v2662 = vunpack.c.h.b16 %v2538
        %v2663 = vunpack.c.h.b16 %v2539
        %v2664 = vunpack.c.h.b16 %v2540
        %v2665 = vunpack.c.h.b16 %v2541
        %v2666 = vunpack.c.l.b16 %v2542
        %v2667 = vunpack.c.l.b16 %v2543
        %v2668 = vunpack.c.l.b16 %v2544
        %v2669 = vunpack.c.l.b16 %v2545
        %v2670 = vunpack.c.h.b16 %v2542
        %v2671 = vunpack.c.h.b16 %v2543
        %v2672 = vunpack.c.h.b16 %v2544
        %v2673 = vunpack.c.h.b16 %v2545
        %v2674 = vpack.c.b16 %v2611, %v2610
        %v2675 = vpack.c.b16 %v2613, %v2612
        %v2676 = vpack.c.b16 %v2615, %v2614
        %v2677 = vpack.c.b16 %v2617, %v2616
        %v2678 = vpack.c.b16 %v2619, %v2618
        %v2679 = vpack.c.b16 %v2621, %v2620
        %v2680 = vpack.c.b16 %v2623, %v2622
        %v2681 = vpack.c.b16 %v2625, %v2624
        %v2682 = vpack.c.b16 %v2627, %v2626
        %v2683 = vpack.c.b16 %v2629, %v2628
        %v2684 = vpack.c.b16 %v2631, %v2630
        %v2685 = vpack.c.b16 %v2633, %v2632
        %v2686 = vpack.c.b16 %v2635, %v2634
        %v2687 = vpack.c.b16 %v2637, %v2636
        %v2688 = vpack.c.b16 %v2639, %v2638
        %v2689 = vpack.c.b16 %v2641, %v2640
        %v2690 = vpack.c.b16 %v2643, %v2642
        %v2691 = vpack.c.b16 %v2645, %v2644
        %v2692 = vpack.c.b16 %v2647, %v2646
        %v2693 = vpack.c.b16 %v2649, %v2648
        %v2694 = vpack.c.b16 %v2651, %v2650
        %v2695 = vpack.c.b16 %v2653, %v2652
        %v2696 = vpack.c.b16 %v2655, %v2654
        %v2697 = vpack.c.b16 %v2657, %v2656
        %v2698 = vpack.c.b16 %v2659, %v2658
        %v2699 = vpack.c.b16 %v2661, %v2660
        %v2700 = vpack.c.b16 %v2663, %v2662
        %v2701 = vpack.c.b16 %v2665, %v2664
        %v2702 = vpack.c.b16 %v2667, %v2666
        %v2703 = vpack.c.b16 %v2669, %v2668
        %v2704 = vpack.c.b16 %v2671, %v2670
        %v2705 = vpack.c.b16 %v2673, %v2672
        %2738 = vst [vmem:[%s302] sm:$0xff] %v2674
        %2739 = vst [vmem:[%s302 + $0x8] sm:$0xff] %v2675
        %2740 = vst [vmem:[%s302 + $0x10] sm:$0xff] %v2676
        %2741 = vst [vmem:[%s302 + $0x18] sm:$0xff] %v2677
        %2742 = vst [vmem:[%s302 + $0x20] sm:$0xff] %v2678
        %2743 = vst [vmem:[%s302 + $0x28] sm:$0xff] %v2679
        %2744 = vst [vmem:[%s302 + $0x30] sm:$0xff] %v2680
        %2745 = vst [vmem:[%s302 + $0x38] sm:$0xff] %v2681
        %2746 = vst [vmem:[%s302 + $0x40] sm:$0xff] %v2682
        %2747 = vst [vmem:[%s302 + $0x48] sm:$0xff] %v2683
        %2748 = vst [vmem:[%s302 + $0x50] sm:$0xff] %v2684
        %2749 = vst [vmem:[%s302 + $0x58] sm:$0xff] %v2685
        %2750 = vst [vmem:[%s302 + $0x60] sm:$0xff] %v2686
        %2751 = vst [vmem:[%s302 + $0x68] sm:$0xff] %v2687
        %2752 = vst [vmem:[%s302 + $0x70] sm:$0xff] %v2688
        %2753 = vst [vmem:[%s302 + $0x78] sm:$0xff] %v2689
        %2754 = vst [vmem:[%s302 + $0x80] sm:$0xff] %v2690
        %2755 = vst [vmem:[%s302 + $0x88] sm:$0xff] %v2691
        %2756 = vst [vmem:[%s302 + $0x90] sm:$0xff] %v2692
        %2757 = vst [vmem:[%s302 + $0x98] sm:$0xff] %v2693
        %2758 = vst [vmem:[%s302 + $0xa0] sm:$0xff] %v2694
        %2759 = vst [vmem:[%s302 + $0xa8] sm:$0xff] %v2695
        %2760 = vst [vmem:[%s302 + $0xb0] sm:$0xff] %v2696
        %2761 = vst [vmem:[%s302 + $0xb8] sm:$0xff] %v2697
        %2762 = vst [vmem:[%s302 + $0xc0] sm:$0xff] %v2698
        %2763 = vst [vmem:[%s302 + $0xc8] sm:$0xff] %v2699
        %2764 = vst [vmem:[%s302 + $0xd0] sm:$0xff] %v2700
        %2765 = vst [vmem:[%s302 + $0xd8] sm:$0xff] %v2701
        %2766 = vst [vmem:[%s302 + $0xe0] sm:$0xff] %v2702
        %2767 = vst [vmem:[%s302 + $0xe8] sm:$0xff] %v2703
        %2768 = vst [vmem:[%s302 + $0xf0] sm:$0xff] %v2704
        %2769 = vst [vmem:[%s302 + $0xf8] sm:$0xff] %v2705
        %v2802 = vunpack.c.l.b16 %v2546
        %v2803 = vunpack.c.l.b16 %v2547
        %v2804 = vunpack.c.l.b16 %v2548
        %v2805 = vunpack.c.l.b16 %v2549
        %v2806 = vunpack.c.h.b16 %v2546
        %v2807 = vunpack.c.h.b16 %v2547
        %v2808 = vunpack.c.h.b16 %v2548
        %v2809 = vunpack.c.h.b16 %v2549
        %v2810 = vunpack.c.l.b16 %v2550
        %v2811 = vunpack.c.l.b16 %v2551
        %v2812 = vunpack.c.l.b16 %v2552
        %v2813 = vunpack.c.l.b16 %v2553
        %v2814 = vunpack.c.h.b16 %v2550
        %v2815 = vunpack.c.h.b16 %v2551
        %v2816 = vunpack.c.h.b16 %v2552
        %v2817 = vunpack.c.h.b16 %v2553
        %v2818 = vunpack.c.l.b16 %v2554
        %v2819 = vunpack.c.l.b16 %v2555
        %v2820 = vunpack.c.l.b16 %v2556
        %v2821 = vunpack.c.l.b16 %v2557
        %v2822 = vunpack.c.h.b16 %v2554
        %v2823 = vunpack.c.h.b16 %v2555
        %v2824 = vunpack.c.h.b16 %v2556
        %v2825 = vunpack.c.h.b16 %v2557
        %v2826 = vunpack.c.l.b16 %v2558
        %v2827 = vunpack.c.l.b16 %v2559
        %v2828 = vunpack.c.l.b16 %v2560
        %v2829 = vunpack.c.l.b16 %v2561
        %v2830 = vunpack.c.h.b16 %v2558
        %v2831 = vunpack.c.h.b16 %v2559
        %v2832 = vunpack.c.h.b16 %v2560
        %v2833 = vunpack.c.h.b16 %v2561
        %v2834 = vunpack.c.l.b16 %v2562
        %v2835 = vunpack.c.l.b16 %v2563
        %v2836 = vunpack.c.l.b16 %v2564
        %v2837 = vunpack.c.l.b16 %v2565
        %v2838 = vunpack.c.h.b16 %v2562
        %v2839 = vunpack.c.h.b16 %v2563
        %v2840 = vunpack.c.h.b16 %v2564
        %v2841 = vunpack.c.h.b16 %v2565
        %v2842 = vunpack.c.l.b16 %v2566
        %v2843 = vunpack.c.l.b16 %v2567
        %v2844 = vunpack.c.l.b16 %v2568
        %v2845 = vunpack.c.l.b16 %v2569
        %v2846 = vunpack.c.h.b16 %v2566
        %v2847 = vunpack.c.h.b16 %v2567
        %v2848 = vunpack.c.h.b16 %v2568
        %v2849 = vunpack.c.h.b16 %v2569
        %v2850 = vunpack.c.l.b16 %v2570
        %v2851 = vunpack.c.l.b16 %v2571
        %v2852 = vunpack.c.l.b16 %v2572
        %v2853 = vunpack.c.l.b16 %v2573
        %v2854 = vunpack.c.h.b16 %v2570
        %v2855 = vunpack.c.h.b16 %v2571
        %v2856 = vunpack.c.h.b16 %v2572
        %v2857 = vunpack.c.h.b16 %v2573
        %v2858 = vunpack.c.l.b16 %v2574
        %v2859 = vunpack.c.l.b16 %v2575
        %v2860 = vunpack.c.l.b16 %v2576
        %v2861 = vunpack.c.l.b16 %v2577
        %v2862 = vunpack.c.h.b16 %v2574
        %v2863 = vunpack.c.h.b16 %v2575
        %v2864 = vunpack.c.h.b16 %v2576
        %v2865 = vunpack.c.h.b16 %v2577
        %v2866 = vpack.c.b16 %v2803, %v2802
        %v2867 = vpack.c.b16 %v2805, %v2804
        %v2868 = vpack.c.b16 %v2807, %v2806
        %v2869 = vpack.c.b16 %v2809, %v2808
        %v2870 = vpack.c.b16 %v2811, %v2810
        %v2871 = vpack.c.b16 %v2813, %v2812
        %v2872 = vpack.c.b16 %v2815, %v2814
        %v2873 = vpack.c.b16 %v2817, %v2816
        %v2874 = vpack.c.b16 %v2819, %v2818
        %v2875 = vpack.c.b16 %v2821, %v2820
        %v2876 = vpack.c.b16 %v2823, %v2822
        %v2877 = vpack.c.b16 %v2825, %v2824
        %v2878 = vpack.c.b16 %v2827, %v2826
        %v2879 = vpack.c.b16 %v2829, %v2828
        %v2880 = vpack.c.b16 %v2831, %v2830
        %v2881 = vpack.c.b16 %v2833, %v2832
        %v2882 = vpack.c.b16 %v2835, %v2834
        %v2883 = vpack.c.b16 %v2837, %v2836
        %v2884 = vpack.c.b16 %v2839, %v2838
        %v2885 = vpack.c.b16 %v2841, %v2840
        %v2886 = vpack.c.b16 %v2843, %v2842
        %v2887 = vpack.c.b16 %v2845, %v2844
        %v2888 = vpack.c.b16 %v2847, %v2846
        %v2889 = vpack.c.b16 %v2849, %v2848
        %v2890 = vpack.c.b16 %v2851, %v2850
        %v2891 = vpack.c.b16 %v2853, %v2852
        %v2892 = vpack.c.b16 %v2855, %v2854
        %v2893 = vpack.c.b16 %v2857, %v2856
        %v2894 = vpack.c.b16 %v2859, %v2858
        %v2895 = vpack.c.b16 %v2861, %v2860
        %v2896 = vpack.c.b16 %v2863, %v2862
        %v2897 = vpack.c.b16 %v2865, %v2864
        %2930 = vst [vmem:[%s309] sm:$0xff] %v2866
        %2931 = vst [vmem:[%s309 + $0x8] sm:$0xff] %v2867
        %2932 = vst [vmem:[%s309 + $0x10] sm:$0xff] %v2868
        %2933 = vst [vmem:[%s309 + $0x18] sm:$0xff] %v2869
        %2934 = vst [vmem:[%s309 + $0x20] sm:$0xff] %v2870
        %2935 = vst [vmem:[%s309 + $0x28] sm:$0xff] %v2871
        %2936 = vst [vmem:[%s309 + $0x30] sm:$0xff] %v2872
        %2937 = vst [vmem:[%s309 + $0x38] sm:$0xff] %v2873
        %2938 = vst [vmem:[%s309 + $0x40] sm:$0xff] %v2874
        %2939 = vst [vmem:[%s309 + $0x48] sm:$0xff] %v2875
        %2940 = vst [vmem:[%s309 + $0x50] sm:$0xff] %v2876
        %2941 = vst [vmem:[%s309 + $0x58] sm:$0xff] %v2877
        %2942 = vst [vmem:[%s309 + $0x60] sm:$0xff] %v2878
        %2943 = vst [vmem:[%s309 + $0x68] sm:$0xff] %v2879
        %2944 = vst [vmem:[%s309 + $0x70] sm:$0xff] %v2880
        %2945 = vst [vmem:[%s309 + $0x78] sm:$0xff] %v2881
        %2946 = vst [vmem:[%s309 + $0x80] sm:$0xff] %v2882
        %2947 = vst [vmem:[%s309 + $0x88] sm:$0xff] %v2883
        %2948 = vst [vmem:[%s309 + $0x90] sm:$0xff] %v2884
        %2949 = vst [vmem:[%s309 + $0x98] sm:$0xff] %v2885
        %2950 = vst [vmem:[%s309 + $0xa0] sm:$0xff] %v2886
        %2951 = vst [vmem:[%s309 + $0xa8] sm:$0xff] %v2887
        %2952 = vst [vmem:[%s309 + $0xb0] sm:$0xff] %v2888
        %2953 = vst [vmem:[%s309 + $0xb8] sm:$0xff] %v2889
        %2954 = vst [vmem:[%s309 + $0xc0] sm:$0xff] %v2890
        %2955 = vst [vmem:[%s309 + $0xc8] sm:$0xff] %v2891
        %2956 = vst [vmem:[%s309 + $0xd0] sm:$0xff] %v2892
        %2957 = vst [vmem:[%s309 + $0xd8] sm:$0xff] %v2893
        %2958 = vst [vmem:[%s309 + $0xe0] sm:$0xff] %v2894
        %2959 = vst [vmem:[%s309 + $0xe8] sm:$0xff] %v2895
        %2960 = vst [vmem:[%s309 + $0xf0] sm:$0xff] %v2896
        %2961 = vst [vmem:[%s309 + $0xf8] sm:$0xff] %v2897
        %s2962 = sand.u32 %s131, 1
        %s2963 = scalar_lea.sflag [#allocation4], %s2962
        %s2964 = sand.u32 %s131, 1
        %s2965 = smul.addr %s2964, 256
        %s2966 = scalar_lea.vmem [#allocation8], %s2965
        %s2967 = sand.u32 %s157, 1
        %s2968 = scalar_lea.sflag [#allocation10], %s2967
        %s2969 = sand.u32 %s157, 1
        %s2970 = smul.addr %s2969, 256
        %s2971 = scalar_lea.vmem [#allocation9], %s2970
        // Predicated region
        $region49: #{tpu_custom_call.1} parent=35 // pred_check
          %p2972 = pneg %p141
        $region50: #{tpu_custom_call.1} parent=35 // pred_check_branch
          %2974 = sbr.rel (%p2972) target = $region52
        $region51: #{tpu_custom_call.1} parent=35 // pred_region
          %s2975 = smul.u32 16, %s29
          %s2977 = ssub.s32 4096, 4096
          %2978 = vsyncadd %s2963, %s2977
          %s2979 = smul.addr %s2975, 4
          %s2980 = smul.addr %s2979, 64
          %s2981 = scalar_lea.hbm %s4, %s2980
          %s2982 = sshll.u32 %s2966, 4
          %s2983 = int_to_ptr.vmem [resolvable:$true] %s2982
          %2988 = dma.vmem_to_hbm [thread:$0]  %s2983, 4096, %s2981, %s2963, 256, 256, 16
        $region52: #{tpu_custom_call.1} parent=35 // pred_fallthru
          _
        // Predicated region
        $region53: #{tpu_custom_call.1} parent=35 // pred_check
          %p2989 = pneg %p167
        $region54: #{tpu_custom_call.1} parent=35 // pred_check_branch
          %2991 = sbr.rel (%p2989) target = $region56
        $region55: #{tpu_custom_call.1} parent=35 // pred_region
          %s2992 = smul.u32 16, %s29
          %s2994 = ssub.s32 4096, 4096
          %2995 = vsyncadd %s2968, %s2994
          %s2996 = smul.addr %s2992, 4
          %s2997 = smul.addr %s2996, 64
          %s2998 = scalar_lea.hbm %s5, %s2997
          %s2999 = sshll.u32 %s2971, 4
          %s3000 = int_to_ptr.vmem [resolvable:$true] %s2999
          %3005 = dma.vmem_to_hbm [thread:$0]  %s3000, 4096, %s2998, %s2968, 256, 256, 16
        $region56: #{tpu_custom_call.1} parent=35 // pred_fallthru
          _
      $region36: #{tpu_custom_call.1} parent=5 // pred_fallthru
        _
      %p3006 = scmp.le.s32.totalorder 2, %s24
      // Predicated region
      $region57: #{tpu_custom_call.1} parent=5 // pred_check
        %p3007 = pneg %p3006
      $region58: #{tpu_custom_call.1} parent=5 // pred_check_branch
        %3009 = sbr.rel (%p3007) target = $region60
      $region59: #{tpu_custom_call.1} parent=5 // pred_region
        %s3010 = ssub.s32 %s24, 2
        // Predicated region
        $region61: #{tpu_custom_call.1} parent=59 // pred_check
          %p3011 = pneg %p147
        $region62: #{tpu_custom_call.1} parent=59 // pred_check_branch
          %3013 = sbr.rel (%p3011) target = $region64
        $region63: #{tpu_custom_call.1} parent=59 // pred_region
          %s3014 = sand.u32 %s132, 1
          %s3015 = scalar_lea.sflag [#allocation4], %s3014
          %s3016 = sand.u32 %s132, 1
          %s3017 = smul.addr %s3016, 256
          %s3018 = scalar_lea.vmem [#allocation8], %s3017
          %3019 = dma.done %s3015, 4096
        $region64: #{tpu_custom_call.1} parent=59 // pred_fallthru
          _
        // Predicated region
        $region65: #{tpu_custom_call.1} parent=59 // pred_check
          %p3020 = pneg %p173
        $region66: #{tpu_custom_call.1} parent=59 // pred_check_branch
          %3022 = sbr.rel (%p3020) target = $region68
        $region67: #{tpu_custom_call.1} parent=59 // pred_region
          %s3023 = sand.u32 %s158, 1
          %s3024 = scalar_lea.sflag [#allocation10], %s3023
          %s3025 = sand.u32 %s158, 1
          %s3026 = smul.addr %s3025, 256
          %s3027 = scalar_lea.vmem [#allocation9], %s3026
          %3028 = dma.done %s3024, 4096
        $region68: #{tpu_custom_call.1} parent=59 // pred_fallthru
          _
      $region60: #{tpu_custom_call.1} parent=5 // pred_fallthru
        _
    $region6: #{tpu_custom_call.1} parent=1 // loop_footer
      %s28 = sadd.s32 1, %s24
    $region7: #{tpu_custom_call.1} parent=1 // loop_footer_branch
      %23 = sbr.rel target = $region3
    $region8: #{tpu_custom_call.1} parent=1 // loop_exit
      _
    %3029 = vsyncpa [#allocation3], 1
    %s3030 = scalar_lea.sflag [#allocation3], 1
    %3031 = vsyncpa %s3030, 1
    %3032 = vsyncpa [#allocation6], 1
    %s3033 = scalar_lea.sflag [#allocation6], 1
    %3034 = vsyncpa %s3033, 1
    %3035 = vsyncpa [#allocation4], 1
    %s3036 = scalar_lea.sflag [#allocation4], 1
    %3037 = vsyncpa %s3036, 1
    %3038 = vsyncpa [#allocation10], 1
    %s3039 = scalar_lea.sflag [#allocation10], 1
    %3040 = vsyncpa %s3039, 1

</llo_original>
